<compile_context>
chip_gen: v6e
topology: v6e:2x2x1
jax: 0.10.0
libtpu: 0.0.40
codegen_flags: <defaults>
</compile_context>

<pallas_src>
import functools
import math

import jax
import jax.numpy as jnp
from jax import lax
from jax.experimental import pallas as pl
from jax.experimental.pallas import tpu as pltpu


def _mha_kernel(scale, num_heads,
                x_ref, wq_ref, wk_ref, wv_ref, wo_ref,
                bq_ref, bk_ref, bv_ref, bo_ref,
                out_ref):
    """One grid step = one batch element, all heads fused."""
    _, S, H = x_ref.shape
    d = H // num_heads

    x = x_ref[0]                                            # (S, H)

    # Full-width QKV projections on the MXU (N = H, not N = d).  The softmax
    # scale is folded into q so the scale multiply touches (S, H), never the
    # (S, S) scores.
    q = (jnp.dot(x, wq_ref[...], preferred_element_type=jnp.float32)
         + bq_ref[...]) * scale                             # (S, H)
    k = jnp.dot(x, wk_ref[...], preferred_element_type=jnp.float32) + bk_ref[...]
    v = jnp.dot(x, wv_ref[...], preferred_element_type=jnp.float32) + bv_ref[...]
    wo = wo_ref[...]                                        # (H, H)

    # Per-head attention, statically unrolled (nh is small); slices are static
    # so no dynamic lane indexing.  Output-projection partial sums accumulate
    # in registers and hit the output ref exactly once.
    acc = jnp.zeros((S, H), dtype=jnp.float32)
    for h in range(num_heads):
        lo, hi = h * d, (h + 1) * d
        qh = q[:, lo:hi]                                    # (S, d)
        kh = k[:, lo:hi]                                    # (S, d)
        vh = v[:, lo:hi]                                    # (S, d)

        # scores = qh @ kh^T expressed as a contraction over d (no transpose).
        s = lax.dot_general(qh, kh, (((1,), (1,)), ((), ())),
                            preferred_element_type=jnp.float32)   # (S, S)

        # Numerically-stable softmax with deferred normalization.
        m = jnp.max(s, axis=-1, keepdims=True)
        e = jnp.exp(s - m)                                  # (S, S)
        denom = jnp.sum(e, axis=-1, keepdims=True)          # (S, 1)
        o = jnp.dot(e, vh, preferred_element_type=jnp.float32)    # (S, d)
        o = o * (1.0 / denom)

        # This head's slice of the output projection.
        acc = acc + jnp.dot(o, wo[lo:hi, :],
                            preferred_element_type=jnp.float32)   # (S, H)

    out_ref[0] = (acc + bo_ref[...]).astype(out_ref.dtype)


def multi_head_attention(x, params, num_heads):
    """x: (B, S, H) float32. params: (H, H) weights in (in,out) layout, (1, H) biases."""
    B, S, H = x.shape
    assert H % num_heads == 0, "hidden_size must be divisible by num_heads"
    d = H // num_heads
    scale = 1.0 / math.sqrt(d)

    kernel = functools.partial(_mha_kernel, scale, num_heads)

    x_spec = pl.BlockSpec((1, S, H), lambda b: (b, 0, 0))
    # Constant block index -> weights/biases are DMA'd once and stay resident
    # in VMEM across the whole batch grid.
    w_spec = pl.BlockSpec((H, H), lambda b: (0, 0))
    b_spec = pl.BlockSpec((1, H), lambda b: (0, 0))

    flops = 8 * B * S * H * H + 4 * B * num_heads * S * S * d
    transcendentals = B * num_heads * S * S
    # x read + out write + weights/biases read exactly once (resident blocks).
    bytes_accessed = 4 * (2 * B * S * H + 4 * H * H + 4 * H)

    return pl.pallas_call(
        kernel,
        out_shape=jax.ShapeDtypeStruct((B, S, H), x.dtype),
        grid_spec=pltpu.PrefetchScalarGridSpec(
            num_scalar_prefetch=0,
            grid=(B,),
            in_specs=[x_spec,
                      w_spec, w_spec, w_spec, w_spec,
                      b_spec, b_spec, b_spec, b_spec],
            out_specs=pl.BlockSpec((1, S, H), lambda b: (b, 0, 0)),
        ),
        compiler_params=pltpu.CompilerParams(
            dimension_semantics=("parallel",)),
        cost_estimate=pl.CostEstimate(
            flops=flops,
            transcendentals=transcendentals,
            bytes_accessed=bytes_accessed),
    )(x, params["wq"], params["wk"], params["wv"], params["wo"],
      params["bq"], params["bk"], params["bv"], params["bo"])


def _reference(x, params, num_heads):
    """Plain-JAX reference reproducing the PyTorch forward semantics."""
    B, S, H = x.shape
    d = H // num_heads

    def proj(w, b):
        return x @ w + b                                            # (B, S, H)

    def split(t):
        return t.reshape(B, S, num_heads, d).transpose(0, 2, 1, 3)  # (B, nh, S, d)

    Q = split(proj(params["wq"], params["bq"]))
    K = split(proj(params["wk"], params["bk"]))
    V = split(proj(params["wv"], params["bv"]))

    scores = jnp.einsum("bhqd,bhkd->bhqk", Q, K) / math.sqrt(d)
    weights = jax.nn.softmax(scores, axis=-1)
    attended = jnp.einsum("bhqk,bhkd->bhqd", weights, V)
    attended = attended.transpose(0, 2, 1, 3).reshape(B, S, H)
    return attended @ params["wo"] + params["bo"]


def init_params(key, hidden_size):
    """Deterministic torch.nn.Linear-style init: U(-1/sqrt(H), 1/sqrt(H))."""
    bound = 1.0 / math.sqrt(hidden_size)
    names = ["wq", "wk", "wv", "wo", "bq", "bk", "bv", "bo"]
    keys = jax.random.split(key, len(names))
    params = {}
    for name, k in zip(names, keys):
        shape = (hidden_size, hidden_size) if name.startswith("w") else (1, hidden_size)
        params[name] = jax.random.uniform(
            k, shape, dtype=jnp.float32, minval=-bound, maxval=bound)
    return params


if __name__ == "__main__":
    batch, seq_len, hidden_size, num_heads = 2, 8, 32, 8

    key = jax.random.PRNGKey(0)
    kx, kp = jax.random.split(key)
    x = jax.random.normal(kx, (batch, seq_len, hidden_size), dtype=jnp.float32)
    params = init_params(kp, hidden_size)

    out = multi_head_attention(x, params, num_heads)
    out = jax.block_until_ready(out)

    ref = _reference(x, params, num_heads)
    assert out.shape == (batch, seq_len, hidden_size)
    assert jnp.allclose(out, ref, atol=1e-5, rtol=1e-5), "Pallas output mismatch vs reference"

    print("KERNEL_OK")
</pallas_src>

<mosaic_0001>
module attributes {stable_mosaic.version = 11 : i64} {
  func.func @_mha_kernel(%arg0: i32, %arg1: memref<1x8x32xf32, #tpu.memory_space<vmem>>, %arg2: memref<32x32xf32, #tpu.memory_space<vmem>>, %arg3: memref<32x32xf32, #tpu.memory_space<vmem>>, %arg4: memref<32x32xf32, #tpu.memory_space<vmem>>, %arg5: memref<32x32xf32, #tpu.memory_space<vmem>>, %arg6: memref<1x32xf32, #tpu.memory_space<vmem>>, %arg7: memref<1x32xf32, #tpu.memory_space<vmem>>, %arg8: memref<1x32xf32, #tpu.memory_space<vmem>>, %arg9: memref<1x32xf32, #tpu.memory_space<vmem>>, %arg10: memref<1x8x32xf32, #tpu.memory_space<vmem>>) attributes {dimension_semantics = [#tpu.dimension_semantics<parallel>], iteration_bounds = array<i64: 2>, scalar_prefetch = 0 : i64, scratch_operands = 0 : i64, tpu.core_type = #tpu.core_type<tc>, window_params = [{transform_indices = @transform_0, window_bounds = array<i64: 1, 8, 32>}, {pipeline_mode = #tpu.pipeline_mode<synchronous>, transform_indices = @transform_1, window_bounds = array<i64: 32, 32>}, {pipeline_mode = #tpu.pipeline_mode<synchronous>, transform_indices = @transform_2, window_bounds = array<i64: 32, 32>}, {pipeline_mode = #tpu.pipeline_mode<synchronous>, transform_indices = @transform_3, window_bounds = array<i64: 32, 32>}, {pipeline_mode = #tpu.pipeline_mode<synchronous>, transform_indices = @transform_4, window_bounds = array<i64: 32, 32>}, {pipeline_mode = #tpu.pipeline_mode<synchronous>, transform_indices = @transform_5, window_bounds = array<i64: 1, 32>}, {pipeline_mode = #tpu.pipeline_mode<synchronous>, transform_indices = @transform_6, window_bounds = array<i64: 1, 32>}, {pipeline_mode = #tpu.pipeline_mode<synchronous>, transform_indices = @transform_7, window_bounds = array<i64: 1, 32>}, {pipeline_mode = #tpu.pipeline_mode<synchronous>, transform_indices = @transform_8, window_bounds = array<i64: 1, 32>}, {transform_indices = @transform_9, window_bounds = array<i64: 1, 8, 32>}]} {
    %c0 = arith.constant 0 : index
    %c0_0 = arith.constant 0 : index
    %c0_1 = arith.constant 0 : index
    %0 = vector.load %arg1[%c0, %c0_0, %c0_1] : memref<1x8x32xf32, #tpu.memory_space<vmem>>, vector<1x8x32xf32>
    %1 = vector.shape_cast %0 : vector<1x8x32xf32> to vector<8x32xf32>
    %c0_2 = arith.constant 0 : index
    %c0_3 = arith.constant 0 : index
    %2 = vector.load %arg2[%c0_2, %c0_3] : memref<32x32xf32, #tpu.memory_space<vmem>>, vector<32x32xf32>
    %cst = arith.constant dense<0.000000e+00> : vector<8x32xf32>
    %3 = tpu.matmul %1, %2, %cst {dimension_numbers = #tpu.dot_dimension_numbers<[1], [0], [0], [1], [0, 0, 1, 1], [], []>} : vector<8x32xf32>, vector<32x32xf32>, vector<8x32xf32> -> vector<8x32xf32>
    %c0_4 = arith.constant 0 : index
    %c0_5 = arith.constant 0 : index
    %4 = vector.load %arg6[%c0_4, %c0_5] : memref<1x32xf32, #tpu.memory_space<vmem>>, vector<1x32xf32>
    %5 = vector.broadcast %4 : vector<1x32xf32> to vector<8x32xf32>
    %6 = arith.addf %3, %5 : vector<8x32xf32>
    %cst_6 = arith.constant 5.000000e-01 : f32
    %7 = vector.broadcast %cst_6 : f32 to vector<8x32xf32>
    %8 = arith.mulf %6, %7 : vector<8x32xf32>
    %c0_7 = arith.constant 0 : index
    %c0_8 = arith.constant 0 : index
    %9 = vector.load %arg3[%c0_7, %c0_8] : memref<32x32xf32, #tpu.memory_space<vmem>>, vector<32x32xf32>
    %cst_9 = arith.constant dense<0.000000e+00> : vector<8x32xf32>
    %10 = tpu.matmul %1, %9, %cst_9 {dimension_numbers = #tpu.dot_dimension_numbers<[1], [0], [0], [1], [0, 0, 1, 1], [], []>} : vector<8x32xf32>, vector<32x32xf32>, vector<8x32xf32> -> vector<8x32xf32>
    %c0_10 = arith.constant 0 : index
    %c0_11 = arith.constant 0 : index
    %11 = vector.load %arg7[%c0_10, %c0_11] : memref<1x32xf32, #tpu.memory_space<vmem>>, vector<1x32xf32>
    %12 = vector.broadcast %11 : vector<1x32xf32> to vector<8x32xf32>
    %13 = arith.addf %10, %12 : vector<8x32xf32>
    %c0_12 = arith.constant 0 : index
    %c0_13 = arith.constant 0 : index
    %14 = vector.load %arg4[%c0_12, %c0_13] : memref<32x32xf32, #tpu.memory_space<vmem>>, vector<32x32xf32>
    %cst_14 = arith.constant dense<0.000000e+00> : vector<8x32xf32>
    %15 = tpu.matmul %1, %14, %cst_14 {dimension_numbers = #tpu.dot_dimension_numbers<[1], [0], [0], [1], [0, 0, 1, 1], [], []>} : vector<8x32xf32>, vector<32x32xf32>, vector<8x32xf32> -> vector<8x32xf32>
    %c0_15 = arith.constant 0 : index
    %c0_16 = arith.constant 0 : index
    %16 = vector.load %arg8[%c0_15, %c0_16] : memref<1x32xf32, #tpu.memory_space<vmem>>, vector<1x32xf32>
    %17 = vector.broadcast %16 : vector<1x32xf32> to vector<8x32xf32>
    %18 = arith.addf %15, %17 : vector<8x32xf32>
    %c0_17 = arith.constant 0 : index
    %c0_18 = arith.constant 0 : index
    %19 = vector.load %arg5[%c0_17, %c0_18] : memref<32x32xf32, #tpu.memory_space<vmem>>, vector<32x32xf32>
    %cst_19 = arith.constant 0.000000e+00 : f32
    %20 = vector.broadcast %cst_19 : f32 to vector<8x32xf32>
    %21 = vector.extract_strided_slice %8 {offsets = [0, 0], sizes = [8, 4], strides = [1, 1]} : vector<8x32xf32> to vector<8x4xf32>
    %22 = vector.extract_strided_slice %13 {offsets = [0, 0], sizes = [8, 4], strides = [1, 1]} : vector<8x32xf32> to vector<8x4xf32>
    %23 = vector.extract_strided_slice %18 {offsets = [0, 0], sizes = [8, 4], strides = [1, 1]} : vector<8x32xf32> to vector<8x4xf32>
    %cst_20 = arith.constant dense<0.000000e+00> : vector<8x8xf32>
    %24 = tpu.matmul %21, %22, %cst_20 {dimension_numbers = #tpu.dot_dimension_numbers<[1], [1], [0], [0], [0, 0, 1, 0], [], []>} : vector<8x4xf32>, vector<8x4xf32>, vector<8x8xf32> -> vector<8x8xf32>
    %cst_21 = arith.constant dense<0xFF800000> : vector<8xf32>
    %25 = vector.multi_reduction <maximumf>, %24, %cst_21 [1] : vector<8x8xf32> to vector<8xf32>
    %26 = vector.shape_cast %25 : vector<8xf32> to vector<8x1xf32>
    %27 = vector.broadcast %26 : vector<8x1xf32> to vector<8x8xf32>
    %28 = arith.subf %24, %27 : vector<8x8xf32>
    %29 = math.exp %28 : vector<8x8xf32>
    %cst_22 = arith.constant dense<0.000000e+00> : vector<8xf32>
    %30 = vector.multi_reduction <add>, %29, %cst_22 [1] : vector<8x8xf32> to vector<8xf32>
    %31 = vector.shape_cast %30 : vector<8xf32> to vector<8x1xf32>
    %cst_23 = arith.constant dense<0.000000e+00> : vector<8x4xf32>
    %32 = tpu.matmul %29, %23, %cst_23 {dimension_numbers = #tpu.dot_dimension_numbers<[1], [0], [0], [1], [0, 0, 1, 1], [], []>} : vector<8x8xf32>, vector<8x4xf32>, vector<8x4xf32> -> vector<8x4xf32>
    %cst_24 = arith.constant 1.000000e+00 : f32
    %33 = vector.broadcast %cst_24 : f32 to vector<8x1xf32>
    %34 = arith.divf %33, %31 : vector<8x1xf32>
    %35 = vector.broadcast %34 : vector<8x1xf32> to vector<8x4xf32>
    %36 = arith.mulf %32, %35 : vector<8x4xf32>
    %37 = vector.extract_strided_slice %19 {offsets = [0, 0], sizes = [4, 32], strides = [1, 1]} : vector<32x32xf32> to vector<4x32xf32>
    %cst_25 = arith.constant dense<0.000000e+00> : vector<8x32xf32>
    %38 = tpu.matmul %36, %37, %cst_25 {dimension_numbers = #tpu.dot_dimension_numbers<[1], [0], [0], [1], [0, 0, 1, 1], [], []>} : vector<8x4xf32>, vector<4x32xf32>, vector<8x32xf32> -> vector<8x32xf32>
    %39 = arith.addf %20, %38 : vector<8x32xf32>
    %40 = vector.extract_strided_slice %8 {offsets = [0, 4], sizes = [8, 4], strides = [1, 1]} : vector<8x32xf32> to vector<8x4xf32>
    %41 = vector.extract_strided_slice %13 {offsets = [0, 4], sizes = [8, 4], strides = [1, 1]} : vector<8x32xf32> to vector<8x4xf32>
    %42 = vector.extract_strided_slice %18 {offsets = [0, 4], sizes = [8, 4], strides = [1, 1]} : vector<8x32xf32> to vector<8x4xf32>
    %cst_26 = arith.constant dense<0.000000e+00> : vector<8x8xf32>
    %43 = tpu.matmul %40, %41, %cst_26 {dimension_numbers = #tpu.dot_dimension_numbers<[1], [1], [0], [0], [0, 0, 1, 0], [], []>} : vector<8x4xf32>, vector<8x4xf32>, vector<8x8xf32> -> vector<8x8xf32>
    %cst_27 = arith.constant dense<0xFF800000> : vector<8xf32>
    %44 = vector.multi_reduction <maximumf>, %43, %cst_27 [1] : vector<8x8xf32> to vector<8xf32>
    %45 = vector.shape_cast %44 : vector<8xf32> to vector<8x1xf32>
    %46 = vector.broadcast %45 : vector<8x1xf32> to vector<8x8xf32>
    %47 = arith.subf %43, %46 : vector<8x8xf32>
    %48 = math.exp %47 : vector<8x8xf32>
    %cst_28 = arith.constant dense<0.000000e+00> : vector<8xf32>
    %49 = vector.multi_reduction <add>, %48, %cst_28 [1] : vector<8x8xf32> to vector<8xf32>
    %50 = vector.shape_cast %49 : vector<8xf32> to vector<8x1xf32>
    %cst_29 = arith.constant dense<0.000000e+00> : vector<8x4xf32>
    %51 = tpu.matmul %48, %42, %cst_29 {dimension_numbers = #tpu.dot_dimension_numbers<[1], [0], [0], [1], [0, 0, 1, 1], [], []>} : vector<8x8xf32>, vector<8x4xf32>, vector<8x4xf32> -> vector<8x4xf32>
    %cst_30 = arith.constant 1.000000e+00 : f32
    %52 = vector.broadcast %cst_30 : f32 to vector<8x1xf32>
    %53 = arith.divf %52, %50 : vector<8x1xf32>
    %54 = vector.broadcast %53 : vector<8x1xf32> to vector<8x4xf32>
    %55 = arith.mulf %51, %54 : vector<8x4xf32>
    %56 = vector.extract_strided_slice %19 {offsets = [4, 0], sizes = [4, 32], strides = [1, 1]} : vector<32x32xf32> to vector<4x32xf32>
    %cst_31 = arith.constant dense<0.000000e+00> : vector<8x32xf32>
    %57 = tpu.matmul %55, %56, %cst_31 {dimension_numbers = #tpu.dot_dimension_numbers<[1], [0], [0], [1], [0, 0, 1, 1], [], []>} : vector<8x4xf32>, vector<4x32xf32>, vector<8x32xf32> -> vector<8x32xf32>
    %58 = arith.addf %39, %57 : vector<8x32xf32>
    %59 = vector.extract_strided_slice %8 {offsets = [0, 8], sizes = [8, 4], strides = [1, 1]} : vector<8x32xf32> to vector<8x4xf32>
    %60 = vector.extract_strided_slice %13 {offsets = [0, 8], sizes = [8, 4], strides = [1, 1]} : vector<8x32xf32> to vector<8x4xf32>
    %61 = vector.extract_strided_slice %18 {offsets = [0, 8], sizes = [8, 4], strides = [1, 1]} : vector<8x32xf32> to vector<8x4xf32>
    %cst_32 = arith.constant dense<0.000000e+00> : vector<8x8xf32>
    %62 = tpu.matmul %59, %60, %cst_32 {dimension_numbers = #tpu.dot_dimension_numbers<[1], [1], [0], [0], [0, 0, 1, 0], [], []>} : vector<8x4xf32>, vector<8x4xf32>, vector<8x8xf32> -> vector<8x8xf32>
    %cst_33 = arith.constant dense<0xFF800000> : vector<8xf32>
    %63 = vector.multi_reduction <maximumf>, %62, %cst_33 [1] : vector<8x8xf32> to vector<8xf32>
    %64 = vector.shape_cast %63 : vector<8xf32> to vector<8x1xf32>
    %65 = vector.broadcast %64 : vector<8x1xf32> to vector<8x8xf32>
    %66 = arith.subf %62, %65 : vector<8x8xf32>
    %67 = math.exp %66 : vector<8x8xf32>
    %cst_34 = arith.constant dense<0.000000e+00> : vector<8xf32>
    %68 = vector.multi_reduction <add>, %67, %cst_34 [1] : vector<8x8xf32> to vector<8xf32>
    %69 = vector.shape_cast %68 : vector<8xf32> to vector<8x1xf32>
    %cst_35 = arith.constant dense<0.000000e+00> : vector<8x4xf32>
    %70 = tpu.matmul %67, %61, %cst_35 {dimension_numbers = #tpu.dot_dimension_numbers<[1], [0], [0], [1], [0, 0, 1, 1], [], []>} : vector<8x8xf32>, vector<8x4xf32>, vector<8x4xf32> -> vector<8x4xf32>
    %cst_36 = arith.constant 1.000000e+00 : f32
    %71 = vector.broadcast %cst_36 : f32 to vector<8x1xf32>
    %72 = arith.divf %71, %69 : vector<8x1xf32>
    %73 = vector.broadcast %72 : vector<8x1xf32> to vector<8x4xf32>
    %74 = arith.mulf %70, %73 : vector<8x4xf32>
    %75 = vector.extract_strided_slice %19 {offsets = [8, 0], sizes = [4, 32], strides = [1, 1]} : vector<32x32xf32> to vector<4x32xf32>
    %cst_37 = arith.constant dense<0.000000e+00> : vector<8x32xf32>
    %76 = tpu.matmul %74, %75, %cst_37 {dimension_numbers = #tpu.dot_dimension_numbers<[1], [0], [0], [1], [0, 0, 1, 1], [], []>} : vector<8x4xf32>, vector<4x32xf32>, vector<8x32xf32> -> vector<8x32xf32>
    %77 = arith.addf %58, %76 : vector<8x32xf32>
    %78 = vector.extract_strided_slice %8 {offsets = [0, 12], sizes = [8, 4], strides = [1, 1]} : vector<8x32xf32> to vector<8x4xf32>
    %79 = vector.extract_strided_slice %13 {offsets = [0, 12], sizes = [8, 4], strides = [1, 1]} : vector<8x32xf32> to vector<8x4xf32>
    %80 = vector.extract_strided_slice %18 {offsets = [0, 12], sizes = [8, 4], strides = [1, 1]} : vector<8x32xf32> to vector<8x4xf32>
    %cst_38 = arith.constant dense<0.000000e+00> : vector<8x8xf32>
    %81 = tpu.matmul %78, %79, %cst_38 {dimension_numbers = #tpu.dot_dimension_numbers<[1], [1], [0], [0], [0, 0, 1, 0], [], []>} : vector<8x4xf32>, vector<8x4xf32>, vector<8x8xf32> -> vector<8x8xf32>
    %cst_39 = arith.constant dense<0xFF800000> : vector<8xf32>
    %82 = vector.multi_reduction <maximumf>, %81, %cst_39 [1] : vector<8x8xf32> to vector<8xf32>
    %83 = vector.shape_cast %82 : vector<8xf32> to vector<8x1xf32>
    %84 = vector.broadcast %83 : vector<8x1xf32> to vector<8x8xf32>
    %85 = arith.subf %81, %84 : vector<8x8xf32>
    %86 = math.exp %85 : vector<8x8xf32>
    %cst_40 = arith.constant dense<0.000000e+00> : vector<8xf32>
    %87 = vector.multi_reduction <add>, %86, %cst_40 [1] : vector<8x8xf32> to vector<8xf32>
    %88 = vector.shape_cast %87 : vector<8xf32> to vector<8x1xf32>
    %cst_41 = arith.constant dense<0.000000e+00> : vector<8x4xf32>
    %89 = tpu.matmul %86, %80, %cst_41 {dimension_numbers = #tpu.dot_dimension_numbers<[1], [0], [0], [1], [0, 0, 1, 1], [], []>} : vector<8x8xf32>, vector<8x4xf32>, vector<8x4xf32> -> vector<8x4xf32>
    %cst_42 = arith.constant 1.000000e+00 : f32
    %90 = vector.broadcast %cst_42 : f32 to vector<8x1xf32>
    %91 = arith.divf %90, %88 : vector<8x1xf32>
    %92 = vector.broadcast %91 : vector<8x1xf32> to vector<8x4xf32>
    %93 = arith.mulf %89, %92 : vector<8x4xf32>
    %94 = vector.extract_strided_slice %19 {offsets = [12, 0], sizes = [4, 32], strides = [1, 1]} : vector<32x32xf32> to vector<4x32xf32>
    %cst_43 = arith.constant dense<0.000000e+00> : vector<8x32xf32>
    %95 = tpu.matmul %93, %94, %cst_43 {dimension_numbers = #tpu.dot_dimension_numbers<[1], [0], [0], [1], [0, 0, 1, 1], [], []>} : vector<8x4xf32>, vector<4x32xf32>, vector<8x32xf32> -> vector<8x32xf32>
    %96 = arith.addf %77, %95 : vector<8x32xf32>
    %97 = vector.extract_strided_slice %8 {offsets = [0, 16], sizes = [8, 4], strides = [1, 1]} : vector<8x32xf32> to vector<8x4xf32>
    %98 = vector.extract_strided_slice %13 {offsets = [0, 16], sizes = [8, 4], strides = [1, 1]} : vector<8x32xf32> to vector<8x4xf32>
    %99 = vector.extract_strided_slice %18 {offsets = [0, 16], sizes = [8, 4], strides = [1, 1]} : vector<8x32xf32> to vector<8x4xf32>
    %cst_44 = arith.constant dense<0.000000e+00> : vector<8x8xf32>
    %100 = tpu.matmul %97, %98, %cst_44 {dimension_numbers = #tpu.dot_dimension_numbers<[1], [1], [0], [0], [0, 0, 1, 0], [], []>} : vector<8x4xf32>, vector<8x4xf32>, vector<8x8xf32> -> vector<8x8xf32>
    %cst_45 = arith.constant dense<0xFF800000> : vector<8xf32>
    %101 = vector.multi_reduction <maximumf>, %100, %cst_45 [1] : vector<8x8xf32> to vector<8xf32>
    %102 = vector.shape_cast %101 : vector<8xf32> to vector<8x1xf32>
    %103 = vector.broadcast %102 : vector<8x1xf32> to vector<8x8xf32>
    %104 = arith.subf %100, %103 : vector<8x8xf32>
    %105 = math.exp %104 : vector<8x8xf32>
    %cst_46 = arith.constant dense<0.000000e+00> : vector<8xf32>
    %106 = vector.multi_reduction <add>, %105, %cst_46 [1] : vector<8x8xf32> to vector<8xf32>
    %107 = vector.shape_cast %106 : vector<8xf32> to vector<8x1xf32>
    %cst_47 = arith.constant dense<0.000000e+00> : vector<8x4xf32>
    %108 = tpu.matmul %105, %99, %cst_47 {dimension_numbers = #tpu.dot_dimension_numbers<[1], [0], [0], [1], [0, 0, 1, 1], [], []>} : vector<8x8xf32>, vector<8x4xf32>, vector<8x4xf32> -> vector<8x4xf32>
    %cst_48 = arith.constant 1.000000e+00 : f32
    %109 = vector.broadcast %cst_48 : f32 to vector<8x1xf32>
    %110 = arith.divf %109, %107 : vector<8x1xf32>
    %111 = vector.broadcast %110 : vector<8x1xf32> to vector<8x4xf32>
    %112 = arith.mulf %108, %111 : vector<8x4xf32>
    %113 = vector.extract_strided_slice %19 {offsets = [16, 0], sizes = [4, 32], strides = [1, 1]} : vector<32x32xf32> to vector<4x32xf32>
    %cst_49 = arith.constant dense<0.000000e+00> : vector<8x32xf32>
    %114 = tpu.matmul %112, %113, %cst_49 {dimension_numbers = #tpu.dot_dimension_numbers<[1], [0], [0], [1], [0, 0, 1, 1], [], []>} : vector<8x4xf32>, vector<4x32xf32>, vector<8x32xf32> -> vector<8x32xf32>
    %115 = arith.addf %96, %114 : vector<8x32xf32>
    %116 = vector.extract_strided_slice %8 {offsets = [0, 20], sizes = [8, 4], strides = [1, 1]} : vector<8x32xf32> to vector<8x4xf32>
    %117 = vector.extract_strided_slice %13 {offsets = [0, 20], sizes = [8, 4], strides = [1, 1]} : vector<8x32xf32> to vector<8x4xf32>
    %118 = vector.extract_strided_slice %18 {offsets = [0, 20], sizes = [8, 4], strides = [1, 1]} : vector<8x32xf32> to vector<8x4xf32>
    %cst_50 = arith.constant dense<0.000000e+00> : vector<8x8xf32>
    %119 = tpu.matmul %116, %117, %cst_50 {dimension_numbers = #tpu.dot_dimension_numbers<[1], [1], [0], [0], [0, 0, 1, 0], [], []>} : vector<8x4xf32>, vector<8x4xf32>, vector<8x8xf32> -> vector<8x8xf32>
    %cst_51 = arith.constant dense<0xFF800000> : vector<8xf32>
    %120 = vector.multi_reduction <maximumf>, %119, %cst_51 [1] : vector<8x8xf32> to vector<8xf32>
    %121 = vector.shape_cast %120 : vector<8xf32> to vector<8x1xf32>
    %122 = vector.broadcast %121 : vector<8x1xf32> to vector<8x8xf32>
    %123 = arith.subf %119, %122 : vector<8x8xf32>
    %124 = math.exp %123 : vector<8x8xf32>
    %cst_52 = arith.constant dense<0.000000e+00> : vector<8xf32>
    %125 = vector.multi_reduction <add>, %124, %cst_52 [1] : vector<8x8xf32> to vector<8xf32>
    %126 = vector.shape_cast %125 : vector<8xf32> to vector<8x1xf32>
    %cst_53 = arith.constant dense<0.000000e+00> : vector<8x4xf32>
    %127 = tpu.matmul %124, %118, %cst_53 {dimension_numbers = #tpu.dot_dimension_numbers<[1], [0], [0], [1], [0, 0, 1, 1], [], []>} : vector<8x8xf32>, vector<8x4xf32>, vector<8x4xf32> -> vector<8x4xf32>
    %cst_54 = arith.constant 1.000000e+00 : f32
    %128 = vector.broadcast %cst_54 : f32 to vector<8x1xf32>
    %129 = arith.divf %128, %126 : vector<8x1xf32>
    %130 = vector.broadcast %129 : vector<8x1xf32> to vector<8x4xf32>
    %131 = arith.mulf %127, %130 : vector<8x4xf32>
    %132 = vector.extract_strided_slice %19 {offsets = [20, 0], sizes = [4, 32], strides = [1, 1]} : vector<32x32xf32> to vector<4x32xf32>
    %cst_55 = arith.constant dense<0.000000e+00> : vector<8x32xf32>
    %133 = tpu.matmul %131, %132, %cst_55 {dimension_numbers = #tpu.dot_dimension_numbers<[1], [0], [0], [1], [0, 0, 1, 1], [], []>} : vector<8x4xf32>, vector<4x32xf32>, vector<8x32xf32> -> vector<8x32xf32>
    %134 = arith.addf %115, %133 : vector<8x32xf32>
    %135 = vector.extract_strided_slice %8 {offsets = [0, 24], sizes = [8, 4], strides = [1, 1]} : vector<8x32xf32> to vector<8x4xf32>
    %136 = vector.extract_strided_slice %13 {offsets = [0, 24], sizes = [8, 4], strides = [1, 1]} : vector<8x32xf32> to vector<8x4xf32>
    %137 = vector.extract_strided_slice %18 {offsets = [0, 24], sizes = [8, 4], strides = [1, 1]} : vector<8x32xf32> to vector<8x4xf32>
    %cst_56 = arith.constant dense<0.000000e+00> : vector<8x8xf32>
    %138 = tpu.matmul %135, %136, %cst_56 {dimension_numbers = #tpu.dot_dimension_numbers<[1], [1], [0], [0], [0, 0, 1, 0], [], []>} : vector<8x4xf32>, vector<8x4xf32>, vector<8x8xf32> -> vector<8x8xf32>
    %cst_57 = arith.constant dense<0xFF800000> : vector<8xf32>
    %139 = vector.multi_reduction <maximumf>, %138, %cst_57 [1] : vector<8x8xf32> to vector<8xf32>
    %140 = vector.shape_cast %139 : vector<8xf32> to vector<8x1xf32>
    %141 = vector.broadcast %140 : vector<8x1xf32> to vector<8x8xf32>
    %142 = arith.subf %138, %141 : vector<8x8xf32>
    %143 = math.exp %142 : vector<8x8xf32>
    %cst_58 = arith.constant dense<0.000000e+00> : vector<8xf32>
    %144 = vector.multi_reduction <add>, %143, %cst_58 [1] : vector<8x8xf32> to vector<8xf32>
    %145 = vector.shape_cast %144 : vector<8xf32> to vector<8x1xf32>
    %cst_59 = arith.constant dense<0.000000e+00> : vector<8x4xf32>
    %146 = tpu.matmul %143, %137, %cst_59 {dimension_numbers = #tpu.dot_dimension_numbers<[1], [0], [0], [1], [0, 0, 1, 1], [], []>} : vector<8x8xf32>, vector<8x4xf32>, vector<8x4xf32> -> vector<8x4xf32>
    %cst_60 = arith.constant 1.000000e+00 : f32
    %147 = vector.broadcast %cst_60 : f32 to vector<8x1xf32>
    %148 = arith.divf %147, %145 : vector<8x1xf32>
    %149 = vector.broadcast %148 : vector<8x1xf32> to vector<8x4xf32>
    %150 = arith.mulf %146, %149 : vector<8x4xf32>
    %151 = vector.extract_strided_slice %19 {offsets = [24, 0], sizes = [4, 32], strides = [1, 1]} : vector<32x32xf32> to vector<4x32xf32>
    %cst_61 = arith.constant dense<0.000000e+00> : vector<8x32xf32>
    %152 = tpu.matmul %150, %151, %cst_61 {dimension_numbers = #tpu.dot_dimension_numbers<[1], [0], [0], [1], [0, 0, 1, 1], [], []>} : vector<8x4xf32>, vector<4x32xf32>, vector<8x32xf32> -> vector<8x32xf32>
    %153 = arith.addf %134, %152 : vector<8x32xf32>
    %154 = vector.extract_strided_slice %8 {offsets = [0, 28], sizes = [8, 4], strides = [1, 1]} : vector<8x32xf32> to vector<8x4xf32>
    %155 = vector.extract_strided_slice %13 {offsets = [0, 28], sizes = [8, 4], strides = [1, 1]} : vector<8x32xf32> to vector<8x4xf32>
    %156 = vector.extract_strided_slice %18 {offsets = [0, 28], sizes = [8, 4], strides = [1, 1]} : vector<8x32xf32> to vector<8x4xf32>
    %cst_62 = arith.constant dense<0.000000e+00> : vector<8x8xf32>
    %157 = tpu.matmul %154, %155, %cst_62 {dimension_numbers = #tpu.dot_dimension_numbers<[1], [1], [0], [0], [0, 0, 1, 0], [], []>} : vector<8x4xf32>, vector<8x4xf32>, vector<8x8xf32> -> vector<8x8xf32>
    %cst_63 = arith.constant dense<0xFF800000> : vector<8xf32>
    %158 = vector.multi_reduction <maximumf>, %157, %cst_63 [1] : vector<8x8xf32> to vector<8xf32>
    %159 = vector.shape_cast %158 : vector<8xf32> to vector<8x1xf32>
    %160 = vector.broadcast %159 : vector<8x1xf32> to vector<8x8xf32>
    %161 = arith.subf %157, %160 : vector<8x8xf32>
    %162 = math.exp %161 : vector<8x8xf32>
    %cst_64 = arith.constant dense<0.000000e+00> : vector<8xf32>
    %163 = vector.multi_reduction <add>, %162, %cst_64 [1] : vector<8x8xf32> to vector<8xf32>
    %164 = vector.shape_cast %163 : vector<8xf32> to vector<8x1xf32>
    %cst_65 = arith.constant dense<0.000000e+00> : vector<8x4xf32>
    %165 = tpu.matmul %162, %156, %cst_65 {dimension_numbers = #tpu.dot_dimension_numbers<[1], [0], [0], [1], [0, 0, 1, 1], [], []>} : vector<8x8xf32>, vector<8x4xf32>, vector<8x4xf32> -> vector<8x4xf32>
    %cst_66 = arith.constant 1.000000e+00 : f32
    %166 = vector.broadcast %cst_66 : f32 to vector<8x1xf32>
    %167 = arith.divf %166, %164 : vector<8x1xf32>
    %168 = vector.broadcast %167 : vector<8x1xf32> to vector<8x4xf32>
    %169 = arith.mulf %165, %168 : vector<8x4xf32>
    %170 = vector.extract_strided_slice %19 {offsets = [28, 0], sizes = [4, 32], strides = [1, 1]} : vector<32x32xf32> to vector<4x32xf32>
    %cst_67 = arith.constant dense<0.000000e+00> : vector<8x32xf32>
    %171 = tpu.matmul %169, %170, %cst_67 {dimension_numbers = #tpu.dot_dimension_numbers<[1], [0], [0], [1], [0, 0, 1, 1], [], []>} : vector<8x4xf32>, vector<4x32xf32>, vector<8x32xf32> -> vector<8x32xf32>
    %172 = arith.addf %153, %171 : vector<8x32xf32>
    %c0_68 = arith.constant 0 : index
    %c0_69 = arith.constant 0 : index
    %173 = vector.load %arg9[%c0_68, %c0_69] : memref<1x32xf32, #tpu.memory_space<vmem>>, vector<1x32xf32>
    %174 = vector.broadcast %173 : vector<1x32xf32> to vector<8x32xf32>
    %175 = arith.addf %172, %174 : vector<8x32xf32>
    %c0_70 = arith.constant 0 : index
    %c0_71 = arith.constant 0 : index
    %c0_72 = arith.constant 0 : index
    %176 = vector.load %arg10[%c0_70, %c0_71, %c0_72] : memref<1x8x32xf32, #tpu.memory_space<vmem>>, vector<1x8x32xf32>
    %177 = vector.shape_cast %176 : vector<1x8x32xf32> to vector<8x32xf32>
    %178 = vector.shape_cast %175 : vector<8x32xf32> to vector<1x8x32xf32>
    tpu.vector_store %arg10[%c0_70, %c0_71, %c0_72], %178 {strides = array<i32>} : memref<1x8x32xf32, #tpu.memory_space<vmem>>, vector<1x8x32xf32>,
    return
  }
  func.func @transform_0(%arg0: i32) -> (i32, i32, i32) {
    %c0_i32 = arith.constant 0 : i32
    %c0_i32_0 = arith.constant 0 : i32
    %c0_i32_1 = arith.constant 0 : i32
    return %arg0, %c0_i32, %c0_i32_0 : i32, i32, i32
  }
  func.func @transform_1(%arg0: i32) -> (i32, i32) {
    %c0_i32 = arith.constant 0 : i32
    %c0_i32_0 = arith.constant 0 : i32
    %c0_i32_1 = arith.constant 0 : i32
    return %c0_i32, %c0_i32_0 : i32, i32
  }
  func.func @transform_2(%arg0: i32) -> (i32, i32) {
    %c0_i32 = arith.constant 0 : i32
    %c0_i32_0 = arith.constant 0 : i32
    %c0_i32_1 = arith.constant 0 : i32
    return %c0_i32, %c0_i32_0 : i32, i32
  }
  func.func @transform_3(%arg0: i32) -> (i32, i32) {
    %c0_i32 = arith.constant 0 : i32
    %c0_i32_0 = arith.constant 0 : i32
    %c0_i32_1 = arith.constant 0 : i32
    return %c0_i32, %c0_i32_0 : i32, i32
  }
  func.func @transform_4(%arg0: i32) -> (i32, i32) {
    %c0_i32 = arith.constant 0 : i32
    %c0_i32_0 = arith.constant 0 : i32
    %c0_i32_1 = arith.constant 0 : i32
    return %c0_i32, %c0_i32_0 : i32, i32
  }
  func.func @transform_5(%arg0: i32) -> (i32, i32) {
    %c0_i32 = arith.constant 0 : i32
    %c0_i32_0 = arith.constant 0 : i32
    %c0_i32_1 = arith.constant 0 : i32
    return %c0_i32, %c0_i32_0 : i32, i32
  }
  func.func @transform_6(%arg0: i32) -> (i32, i32) {
    %c0_i32 = arith.constant 0 : i32
    %c0_i32_0 = arith.constant 0 : i32
    %c0_i32_1 = arith.constant 0 : i32
    return %c0_i32, %c0_i32_0 : i32, i32
  }
  func.func @transform_7(%arg0: i32) -> (i32, i32) {
    %c0_i32 = arith.constant 0 : i32
    %c0_i32_0 = arith.constant 0 : i32
    %c0_i32_1 = arith.constant 0 : i32
    return %c0_i32, %c0_i32_0 : i32, i32
  }
  func.func @transform_8(%arg0: i32) -> (i32, i32) {
    %c0_i32 = arith.constant 0 : i32
    %c0_i32_0 = arith.constant 0 : i32
    %c0_i32_1 = arith.constant 0 : i32
    return %c0_i32, %c0_i32_0 : i32, i32
  }
  func.func @transform_9(%arg0: i32) -> (i32, i32, i32) {
    %c0_i32 = arith.constant 0 : i32
    %c0_i32_0 = arith.constant 0 : i32
    %c0_i32_1 = arith.constant 0 : i32
    return %arg0, %c0_i32, %c0_i32_0 : i32, i32, i32
  }
}

</mosaic_0001>

<llo_original>
// kernel: tpu_custom_call.1
$region0: #{tpu_custom_call.1}
  #allocation0 [shape = 'u32[]', space=smem, size = 0x4, offset = 0x4, fixed_abs, tag = 'smem constant byte address 0x4 - core index']
  #allocation1 [shape = 'u32[144,128]{1,0:T(1,128)}', space=vmem, size = 0x12000, scoped, tag = 'internal scratch']
  %s0 = inlined_call_operand.hbm [shape: f32[2,8,32], index: 0, kind: input, shape index: {}]
  %s1 = inlined_call_operand.hbm [shape: f32[32,32], index: 1, kind: input, shape index: {}]
  %s2 = inlined_call_operand.hbm [shape: f32[32,32], index: 2, kind: input, shape index: {}]
  %s3 = inlined_call_operand.hbm [shape: f32[32,32], index: 3, kind: input, shape index: {}]
  %s4 = inlined_call_operand.hbm [shape: f32[32,32], index: 4, kind: input, shape index: {}]
  %s5 = inlined_call_operand.vmem [shape: f32[1,32], index: 5, kind: input, shape index: {}]
  %s6 = inlined_call_operand.vmem [shape: f32[1,32], index: 6, kind: input, shape index: {}]
  %s7 = inlined_call_operand.vmem [shape: f32[1,32], index: 7, kind: input, shape index: {}]
  %s8 = inlined_call_operand.vmem [shape: f32[1,32], index: 8, kind: input, shape index: {}]
  %s9 = inlined_call_operand.hbm [shape: f32[2,8,32], index: 9, kind: output, shape index: {}]
  %s10 = sld [smem:[#allocation0]]
  $region89: #{tpu_custom_call.1} parent=0
    _
  %s12 = ssub.s32 1, %s10
  %s13 = scalar_select 0, %s12, %s10
  $region1: #{tpu_custom_call.1} parent=0
    #allocation2 [shape = 'u8[8192]{0}', space=vmem, size = 0x2000, scoped, tag = 'input window, operand 0']
    #allocation3 [shape = 's32[2]{0}', space=sflag, size = 0x8, scoped, tag = 'scoped memory for tpu_custom_call.1']
    #allocation4 [shape = 's32[2]{0}', space=sflag, size = 0x8, scoped, tag = 'scoped memory for tpu_custom_call.1']
    #allocation5 [shape = 'u8[16384]{0}', space=vmem, size = 0x4000, scoped, tag = 'input window, operand 1, single buffered']
    #allocation6 [shape = 's32[1]{0}', space=sflag, size = 0x4, scoped, tag = 'scoped memory for tpu_custom_call.1']
    #allocation7 [shape = 'u8[16384]{0}', space=vmem, size = 0x4000, scoped, tag = 'input window, operand 2, single buffered']
    #allocation8 [shape = 'u8[16384]{0}', space=vmem, size = 0x4000, scoped, tag = 'input window, operand 3, single buffered']
    #allocation9 [shape = 's32[1]{0}', space=sflag, size = 0x4, scoped, tag = 'scoped memory for tpu_custom_call.1']
    #allocation10 [shape = 'u8[16384]{0}', space=vmem, size = 0x4000, scoped, tag = 'input window, operand 4, single buffered']
    #allocation11 [shape = 'u8[8192]{0}', space=vmem, size = 0x2000, scoped, tag = 'output window, operand 0']
    %14 = vsyncpa [#allocation3], 0
    %s15 = scalar_lea.sflag [#allocation3], 1
    %16 = vsyncpa %s15, 0
    %17 = vsyncpa [#allocation6], 0
    %18 = vsyncpa [#allocation9], 0
    %19 = vsyncpa [#allocation4], 0
    %s20 = scalar_lea.sflag [#allocation4], 1
    %21 = vsyncpa %s20, 0
    loop: start=0, step=1, limit=4
    $region2: #{tpu_custom_call.1} parent=1 // loop_pre_header
      _
    $region3: #{tpu_custom_call.1} parent=1 // loop_header
      %s23 = sphi 0, %s27
      %p24 = scmp.ge.s32.totalorder %s23, 4
      %s33 = sphi 0, %s35
      %s36 = sphi 0, %s33
      %s37 = sphi 0, %s36
      %s53 = sphi 0, %s37
      %s57 = sphi 0, %s57
      %s59 = sphi 0, %s57
      %s60 = sphi 0, %s59
      %s74 = sphi 0, %s60
      %s78 = sphi 0, %s78
      %s80 = sphi 0, %s78
      %s81 = sphi 0, %s80
      %s95 = sphi 0, %s81
      %s99 = sphi 0, %s99
      %s101 = sphi 0, %s99
      %s102 = sphi 0, %s101
      %s116 = sphi 0, %s102
      %s120 = sphi 0, %s120
      %s122 = sphi 0, %s120
      %s123 = sphi 0, %s122
      %s137 = sphi 0, %s123
      %s141 = sphi 0, %s141
      %s143 = sphi 0, %s141
      %s144 = sphi 0, %s143
      %s158 = sphi 0, %s144
      %s162 = sphi 0, %s162
      %s164 = sphi 0, %s162
      %s165 = sphi 0, %s164
      %s179 = sphi 0, %s165
      %s183 = sphi 0, %s183
      %s185 = sphi 0, %s183
      %s186 = sphi 0, %s185
      %s200 = sphi 0, %s186
      %s204 = sphi 0, %s204
      %s206 = sphi 0, %s204
      %s207 = sphi 0, %s206
      %s221 = sphi 0, %s207
      %s227 = sphi 0, %s229
      %s230 = sphi 0, %s227
      %s231 = sphi 0, %s230
      %s247 = sphi 0, %s231
    $region4: #{tpu_custom_call.1} parent=1 // loop_header_branch
      %26 = sbr.rel (%p24) target = $region8
    $region5: #{tpu_custom_call.1} parent=1 // loop_body
      %s28 = ssub.s32 %s23, 1
      %s29 = ssub.s32 %s23, 2
      %s30 = sadd.s32 %s23, 1
      %s31 = ssub.s32 %s23, %s30
      %p32 = scmp.eq.s32.totalorder %s31, 0
      %s34 = sadd.s32 %s33, 1
      %s35 = scalar_select %p32, %s33, %s34
      %p38 = pneg %p32
      %p39 = scmp.eq.s32.totalorder %s23, 1
      %p40 = por %p38, %p39
      %p41 = scmp.ne.s32.totalorder %s33, %s36
      %p42 = scmp.eq.s32.totalorder %s23, 0
      %p43 = por %p41, %p42
      %p44 = scmp.ne.s32.totalorder %s33, %s36
      %p45 = scmp.eq.s32.totalorder %s28, 1
      %p46 = por %p44, %p45
      %p47 = scmp.ne.s32.totalorder %s36, %s37
      %p48 = scmp.eq.s32.totalorder %s28, 0
      %p49 = por %p47, %p48
      %p50 = scmp.ne.s32.totalorder %s36, %s37
      %p51 = scmp.eq.s32.totalorder %s29, 1
      %p52 = por %p50, %p51
      %p54 = scmp.ne.s32.totalorder %s37, %s53
      %p55 = scmp.eq.s32.totalorder %s29, 0
      %p56 = por %p54, %p55
      %s58 = sadd.s32 %s57, 1
      %p61 = scmp.eq.s32.totalorder %s23, 1
      %p62 = scmp.ne.s32.totalorder %s57, %s59
      %p63 = scmp.eq.s32.totalorder %s23, 0
      %p64 = por %p62, %p63
      %p65 = scmp.ne.s32.totalorder %s57, %s59
      %p66 = scmp.eq.s32.totalorder %s28, 1
      %p67 = por %p65, %p66
      %p68 = scmp.ne.s32.totalorder %s59, %s60
      %p69 = scmp.eq.s32.totalorder %s28, 0
      %p70 = por %p68, %p69
      %p71 = scmp.ne.s32.totalorder %s59, %s60
      %p72 = scmp.eq.s32.totalorder %s29, 1
      %p73 = por %p71, %p72
      %p75 = scmp.ne.s32.totalorder %s60, %s74
      %p76 = scmp.eq.s32.totalorder %s29, 0
      %p77 = por %p75, %p76
      %s79 = sadd.s32 %s78, 1
      %p82 = scmp.eq.s32.totalorder %s23, 1
      %p83 = scmp.ne.s32.totalorder %s78, %s80
      %p84 = scmp.eq.s32.totalorder %s23, 0
      %p85 = por %p83, %p84
      %p86 = scmp.ne.s32.totalorder %s78, %s80
      %p87 = scmp.eq.s32.totalorder %s28, 1
      %p88 = por %p86, %p87
      %p89 = scmp.ne.s32.totalorder %s80, %s81
      %p90 = scmp.eq.s32.totalorder %s28, 0
      %p91 = por %p89, %p90
      %p92 = scmp.ne.s32.totalorder %s80, %s81
      %p93 = scmp.eq.s32.totalorder %s29, 1
      %p94 = por %p92, %p93
      %p96 = scmp.ne.s32.totalorder %s81, %s95
      %p97 = scmp.eq.s32.totalorder %s29, 0
      %p98 = por %p96, %p97
      %s100 = sadd.s32 %s99, 1
      %p103 = scmp.eq.s32.totalorder %s23, 1
      %p104 = scmp.ne.s32.totalorder %s99, %s101
      %p105 = scmp.eq.s32.totalorder %s23, 0
      %p106 = por %p104, %p105
      %p107 = scmp.ne.s32.totalorder %s99, %s101
      %p108 = scmp.eq.s32.totalorder %s28, 1
      %p109 = por %p107, %p108
      %p110 = scmp.ne.s32.totalorder %s101, %s102
      %p111 = scmp.eq.s32.totalorder %s28, 0
      %p112 = por %p110, %p111
      %p113 = scmp.ne.s32.totalorder %s101, %s102
      %p114 = scmp.eq.s32.totalorder %s29, 1
      %p115 = por %p113, %p114
      %p117 = scmp.ne.s32.totalorder %s102, %s116
      %p118 = scmp.eq.s32.totalorder %s29, 0
      %p119 = por %p117, %p118
      %s121 = sadd.s32 %s120, 1
      %p124 = scmp.eq.s32.totalorder %s23, 1
      %p125 = scmp.ne.s32.totalorder %s120, %s122
      %p126 = scmp.eq.s32.totalorder %s23, 0
      %p127 = por %p125, %p126
      %p128 = scmp.ne.s32.totalorder %s120, %s122
      %p129 = scmp.eq.s32.totalorder %s28, 1
      %p130 = por %p128, %p129
      %p131 = scmp.ne.s32.totalorder %s122, %s123
      %p132 = scmp.eq.s32.totalorder %s28, 0
      %p133 = por %p131, %p132
      %p134 = scmp.ne.s32.totalorder %s122, %s123
      %p135 = scmp.eq.s32.totalorder %s29, 1
      %p136 = por %p134, %p135
      %p138 = scmp.ne.s32.totalorder %s123, %s137
      %p139 = scmp.eq.s32.totalorder %s29, 0
      %p140 = por %p138, %p139
      %s142 = sadd.s32 %s141, 1
      %p145 = scmp.eq.s32.totalorder %s23, 1
      %p146 = scmp.ne.s32.totalorder %s141, %s143
      %p147 = scmp.eq.s32.totalorder %s23, 0
      %p148 = por %p146, %p147
      %p149 = scmp.ne.s32.totalorder %s141, %s143
      %p150 = scmp.eq.s32.totalorder %s28, 1
      %p151 = por %p149, %p150
      %p152 = scmp.ne.s32.totalorder %s143, %s144
      %p153 = scmp.eq.s32.totalorder %s28, 0
      %p154 = por %p152, %p153
      %p155 = scmp.ne.s32.totalorder %s143, %s144
      %p156 = scmp.eq.s32.totalorder %s29, 1
      %p157 = por %p155, %p156
      %p159 = scmp.ne.s32.totalorder %s144, %s158
      %p160 = scmp.eq.s32.totalorder %s29, 0
      %p161 = por %p159, %p160
      %s163 = sadd.s32 %s162, 1
      %p166 = scmp.eq.s32.totalorder %s23, 1
      %p167 = scmp.ne.s32.totalorder %s162, %s164
      %p168 = scmp.eq.s32.totalorder %s23, 0
      %p169 = por %p167, %p168
      %p170 = scmp.ne.s32.totalorder %s162, %s164
      %p171 = scmp.eq.s32.totalorder %s28, 1
      %p172 = por %p170, %p171
      %p173 = scmp.ne.s32.totalorder %s164, %s165
      %p174 = scmp.eq.s32.totalorder %s28, 0
      %p175 = por %p173, %p174
      %p176 = scmp.ne.s32.totalorder %s164, %s165
      %p177 = scmp.eq.s32.totalorder %s29, 1
      %p178 = por %p176, %p177
      %p180 = scmp.ne.s32.totalorder %s165, %s179
      %p181 = scmp.eq.s32.totalorder %s29, 0
      %p182 = por %p180, %p181
      %s184 = sadd.s32 %s183, 1
      %p187 = scmp.eq.s32.totalorder %s23, 1
      %p188 = scmp.ne.s32.totalorder %s183, %s185
      %p189 = scmp.eq.s32.totalorder %s23, 0
      %p190 = por %p188, %p189
      %p191 = scmp.ne.s32.totalorder %s183, %s185
      %p192 = scmp.eq.s32.totalorder %s28, 1
      %p193 = por %p191, %p192
      %p194 = scmp.ne.s32.totalorder %s185, %s186
      %p195 = scmp.eq.s32.totalorder %s28, 0
      %p196 = por %p194, %p195
      %p197 = scmp.ne.s32.totalorder %s185, %s186
      %p198 = scmp.eq.s32.totalorder %s29, 1
      %p199 = por %p197, %p198
      %p201 = scmp.ne.s32.totalorder %s186, %s200
      %p202 = scmp.eq.s32.totalorder %s29, 0
      %p203 = por %p201, %p202
      %s205 = sadd.s32 %s204, 1
      %p208 = scmp.eq.s32.totalorder %s23, 1
      %p209 = scmp.ne.s32.totalorder %s204, %s206
      %p210 = scmp.eq.s32.totalorder %s23, 0
      %p211 = por %p209, %p210
      %p212 = scmp.ne.s32.totalorder %s204, %s206
      %p213 = scmp.eq.s32.totalorder %s28, 1
      %p214 = por %p212, %p213
      %p215 = scmp.ne.s32.totalorder %s206, %s207
      %p216 = scmp.eq.s32.totalorder %s28, 0
      %p217 = por %p215, %p216
      %p218 = scmp.ne.s32.totalorder %s206, %s207
      %p219 = scmp.eq.s32.totalorder %s29, 1
      %p220 = por %p218, %p219
      %p222 = scmp.ne.s32.totalorder %s207, %s221
      %p223 = scmp.eq.s32.totalorder %s29, 0
      %p224 = por %p222, %p223
      %s225 = ssub.s32 %s23, %s30
      %p226 = scmp.eq.s32.totalorder %s225, 0
      %s228 = sadd.s32 %s227, 1
      %s229 = scalar_select %p226, %s227, %s228
      %p232 = pneg %p226
      %p233 = scmp.eq.s32.totalorder %s23, 1
      %p234 = por %p232, %p233
      %p235 = scmp.ne.s32.totalorder %s227, %s230
      %p236 = scmp.eq.s32.totalorder %s23, 0
      %p237 = por %p235, %p236
      %p238 = scmp.ne.s32.totalorder %s227, %s230
      %p239 = scmp.eq.s32.totalorder %s28, 1
      %p240 = por %p238, %p239
      %p241 = scmp.ne.s32.totalorder %s230, %s231
      %p242 = scmp.eq.s32.totalorder %s28, 0
      %p243 = por %p241, %p242
      %p244 = scmp.ne.s32.totalorder %s230, %s231
      %p245 = scmp.eq.s32.totalorder %s29, 1
      %p246 = por %p244, %p245
      %p248 = scmp.ne.s32.totalorder %s231, %s247
      %p249 = scmp.eq.s32.totalorder %s29, 0
      %p250 = por %p248, %p249
      %p251 = scmp.le.s32.totalorder 1, %s23
      %p252 = scmp.lt.s32.totalorder %s23, 3
      %p253 = pnand %p251, %p252
      %p254 = pneg %p253
      // Predicated region
      $region9: #{tpu_custom_call.1} parent=5 // pred_check
        _
      $region10: #{tpu_custom_call.1} parent=5 // pred_check_branch
        %256 = sbr.rel (%p253) target = $region12
      $region11: #{tpu_custom_call.1} parent=5 // pred_region
        %s257 = ssub.s32 %s23, 1
        // Predicated region
        $region13: #{tpu_custom_call.1} parent=11 // pred_check
          %p258 = pneg %p70
        $region14: #{tpu_custom_call.1} parent=11 // pred_check_branch
          %260 = sbr.rel (%p258) target = $region16
        $region15: #{tpu_custom_call.1} parent=11 // pred_region
          %s262 = ssub.s32 512, 512
          %263 = vsyncadd [#allocation6], %s262
          %s264 = sshll.u32 [#allocation5], 4
          %s265 = int_to_ptr.vmem [resolvable:$true] %s264
          %270 = dma.hbm_to_vmem [thread:$0]  %s1, 512, %s265, [#allocation6], 128, 128, 8
        $region16: #{tpu_custom_call.1} parent=11 // pred_fallthru
          _
        // Predicated region
        $region17: #{tpu_custom_call.1} parent=11 // pred_check
          %p271 = pneg %p91
        $region18: #{tpu_custom_call.1} parent=11 // pred_check_branch
          %273 = sbr.rel (%p271) target = $region20
        $region19: #{tpu_custom_call.1} parent=11 // pred_region
          %s275 = ssub.s32 512, 512
          %276 = vsyncadd [#allocation6], %s275
          %s277 = sshll.u32 [#allocation7], 4
          %s278 = int_to_ptr.vmem [resolvable:$true] %s277
          %283 = dma.hbm_to_vmem [thread:$0]  %s2, 512, %s278, [#allocation6], 128, 128, 8
        $region20: #{tpu_custom_call.1} parent=11 // pred_fallthru
          _
        // Predicated region
        $region21: #{tpu_custom_call.1} parent=11 // pred_check
          %p284 = pneg %p112
        $region22: #{tpu_custom_call.1} parent=11 // pred_check_branch
          %286 = sbr.rel (%p284) target = $region24
        $region23: #{tpu_custom_call.1} parent=11 // pred_region
          %s288 = ssub.s32 512, 512
          %289 = vsyncadd [#allocation9], %s288
          %s290 = sshll.u32 [#allocation8], 4
          %s291 = int_to_ptr.vmem [resolvable:$true] %s290
          %296 = dma.hbm_to_vmem [thread:$0]  %s3, 512, %s291, [#allocation9], 128, 128, 8
        $region24: #{tpu_custom_call.1} parent=11 // pred_fallthru
          _
        // Predicated region
        $region25: #{tpu_custom_call.1} parent=11 // pred_check
          %p297 = pneg %p133
        $region26: #{tpu_custom_call.1} parent=11 // pred_check_branch
          %299 = sbr.rel (%p297) target = $region28
        $region27: #{tpu_custom_call.1} parent=11 // pred_region
          %s301 = ssub.s32 512, 512
          %302 = vsyncadd [#allocation9], %s301
          %s303 = sshll.u32 [#allocation10], 4
          %s304 = int_to_ptr.vmem [resolvable:$true] %s303
          %309 = dma.hbm_to_vmem [thread:$0]  %s4, 512, %s304, [#allocation9], 128, 128, 8
        $region28: #{tpu_custom_call.1} parent=11 // pred_fallthru
          _
        // Predicated region
        $region29: #{tpu_custom_call.1} parent=11 // pred_check
          %p310 = pneg %p154
        $region30: #{tpu_custom_call.1} parent=11 // pred_check_branch
          %312 = sbr.rel (%p310) target = $region32
        $region31: #{tpu_custom_call.1} parent=11 // pred_region
          _
        $region32: #{tpu_custom_call.1} parent=11 // pred_fallthru
          _
        // Predicated region
        $region33: #{tpu_custom_call.1} parent=11 // pred_check
          %p313 = pneg %p175
        $region34: #{tpu_custom_call.1} parent=11 // pred_check_branch
          %315 = sbr.rel (%p313) target = $region36
        $region35: #{tpu_custom_call.1} parent=11 // pred_region
          _
        $region36: #{tpu_custom_call.1} parent=11 // pred_fallthru
          _
        // Predicated region
        $region37: #{tpu_custom_call.1} parent=11 // pred_check
          %p316 = pneg %p196
        $region38: #{tpu_custom_call.1} parent=11 // pred_check_branch
          %318 = sbr.rel (%p316) target = $region40
        $region39: #{tpu_custom_call.1} parent=11 // pred_region
          _
        $region40: #{tpu_custom_call.1} parent=11 // pred_fallthru
          _
        // Predicated region
        $region41: #{tpu_custom_call.1} parent=11 // pred_check
          %p319 = pneg %p217
        $region42: #{tpu_custom_call.1} parent=11 // pred_check_branch
          %321 = sbr.rel (%p319) target = $region44
        $region43: #{tpu_custom_call.1} parent=11 // pred_region
          _
        $region44: #{tpu_custom_call.1} parent=11 // pred_fallthru
          _
      $region12: #{tpu_custom_call.1} parent=5 // pred_fallthru
        _
      %p322 = scmp.lt.s32.totalorder %s23, 2
      // Predicated region
      $region45: #{tpu_custom_call.1} parent=5 // pred_check
        %p323 = pneg %p322
      $region46: #{tpu_custom_call.1} parent=5 // pred_check_branch
        %325 = sbr.rel (%p323) target = $region48
      $region47: #{tpu_custom_call.1} parent=5 // pred_region
        // Predicated region
        $region49: #{tpu_custom_call.1} parent=47 // pred_check
          %p326 = pneg %p43
        $region50: #{tpu_custom_call.1} parent=47 // pred_check_branch
          %328 = sbr.rel (%p326) target = $region52
        $region51: #{tpu_custom_call.1} parent=47 // pred_region
          %s329 = sand.u32 %s33, 1
          %s330 = scalar_lea.sflag [#allocation3], %s329
          %s331 = sand.u32 %s33, 1
          %s332 = smul.addr %s331, 8
          %s333 = scalar_lea.vmem [#allocation2], %s332
          %s335 = ssub.s32 128, 128
          %336 = vsyncadd %s330, %s335
          %s337 = smul.addr %s23, 128
          %s338 = scalar_lea.hbm %s0, %s337
          %s340 = sshll.u32 %s333, 4
          %s341 = int_to_ptr.vmem [resolvable:$true] %s340
          %343 = dma.hbm_to_vmem [thread:$0]  %s338, 128, %s341, %s330
        $region52: #{tpu_custom_call.1} parent=47 // pred_fallthru
          _
      $region48: #{tpu_custom_call.1} parent=5 // pred_fallthru
        _
      %p344 = scmp.le.s32.totalorder 1, %s23
      %p345 = scmp.lt.s32.totalorder %s23, 3
      %p346 = pnand %p344, %p345
      %p347 = pneg %p346
      // Predicated region
      $region53: #{tpu_custom_call.1} parent=5 // pred_check
        _
      $region54: #{tpu_custom_call.1} parent=5 // pred_check_branch
        %349 = sbr.rel (%p346) target = $region56
      $region55: #{tpu_custom_call.1} parent=5 // pred_region
        %s350 = ssub.s32 %s23, 1
        %s351 = sand.u32 %s36, 1
        %s352 = scalar_lea.sflag [#allocation3], %s351
        %s353 = sand.u32 %s36, 1
        %s354 = smul.addr %s353, 8
        %s355 = scalar_lea.vmem [#allocation2], %s354
        // Predicated region
        $region57: #{tpu_custom_call.1} parent=55 // pred_check
          %p356 = pneg %p49
        $region58: #{tpu_custom_call.1} parent=55 // pred_check_branch
          %358 = sbr.rel (%p356) target = $region60
        $region59: #{tpu_custom_call.1} parent=55 // pred_region
          %359 = dma.done %s352, 128
        $region60: #{tpu_custom_call.1} parent=55 // pred_fallthru
          _
        // Predicated region
        $region61: #{tpu_custom_call.1} parent=55 // pred_check
          %p360 = pneg %p70
        $region62: #{tpu_custom_call.1} parent=55 // pred_check_branch
          %362 = sbr.rel (%p360) target = $region64
        $region63: #{tpu_custom_call.1} parent=55 // pred_region
          %363 = dma.done [#allocation6], 512
        $region64: #{tpu_custom_call.1} parent=55 // pred_fallthru
          _
        // Predicated region
        $region65: #{tpu_custom_call.1} parent=55 // pred_check
          %p364 = pneg %p91
        $region66: #{tpu_custom_call.1} parent=55 // pred_check_branch
          %366 = sbr.rel (%p364) target = $region68
        $region67: #{tpu_custom_call.1} parent=55 // pred_region
          %367 = dma.done [#allocation6], 512
        $region68: #{tpu_custom_call.1} parent=55 // pred_fallthru
          _
        // Predicated region
        $region69: #{tpu_custom_call.1} parent=55 // pred_check
          %p368 = pneg %p112
        $region70: #{tpu_custom_call.1} parent=55 // pred_check_branch
          %370 = sbr.rel (%p368) target = $region72
        $region71: #{tpu_custom_call.1} parent=55 // pred_region
          %371 = dma.done [#allocation9], 512
        $region72: #{tpu_custom_call.1} parent=55 // pred_fallthru
          _
        // Predicated region
        $region73: #{tpu_custom_call.1} parent=55 // pred_check
          %p372 = pneg %p133
        $region74: #{tpu_custom_call.1} parent=55 // pred_check_branch
          %374 = sbr.rel (%p372) target = $region76
        $region75: #{tpu_custom_call.1} parent=55 // pred_region
          %375 = dma.done [#allocation9], 512
        $region76: #{tpu_custom_call.1} parent=55 // pred_fallthru
          _
        %s376 = sand.u32 %s36, 1
        %s377 = scalar_lea.sflag [#allocation3], %s376
        %s378 = sand.u32 %s36, 1
        %s379 = smul.addr %s378, 8
        %s380 = scalar_lea.vmem [#allocation2], %s379
        %p381 = pneg %p49
        %p382 = pneg %p46
        %p383 = pneg %p70
        %p384 = pneg %p67
        %p385 = pneg %p91
        %p386 = pneg %p88
        %p387 = pneg %p112
        %p388 = pneg %p109
        %p389 = pneg %p133
        %p390 = pneg %p130
        %p391 = pneg %p154
        %p392 = pneg %p151
        %p393 = pneg %p175
        %p394 = pneg %p172
        %p395 = pneg %p196
        %p396 = pneg %p193
        %p397 = pneg %p217
        %p398 = pneg %p214
        %p399 = pneg %p243
        %p400 = pneg %p240
        %s401 = sand.u32 %s230, 1
        %s402 = scalar_lea.sflag [#allocation4], %s401
        %s403 = sand.u32 %s230, 1
        %s404 = smul.addr %s403, 8
        %s405 = scalar_lea.vmem [#allocation11], %s404
        %v406 = vld [vmem:[%s355] sm:$0xff]
        %v407 = vld [vmem:[#allocation5] sm:$0xff]
        %v408 = vld [vmem:[#allocation5 + $0x8] sm:$0xff]
        %v409 = vld [vmem:[#allocation5 + $0x10] sm:$0xff]
        %v410 = vld [vmem:[#allocation5 + $0x18] sm:$0xff]
        %v411 = vld [vmem:[%s5] sm:$0x1]
        %v413 = vlaneseq
        %v414 = vshrl.u32 %v413, 7
        %v415 = vsub.s32 0, %v414
        %v416 = vrot.slane %v411, %v415
        %vm418 = vcmask 261120
        %v420 = vsel %vm418, %v406, 0
        %422 = vmatprep.subr.mxu0 0.0
        %423 = vmatpush1.msra.mxu0 0.0
        %424 = vmatprep.subr.mxu0 0.0
        %425 = vmatpush1.msra.mxu0 0.0
        %426 = vmatprep.subr.mxu0 0.0
        %427 = vmatpush1.msra.mxu0 0.0
        %428 = vmatprep.subr.mxu0 0.0
        %429 = vmatpush1.msra.mxu0 0.0
        %430 = vmatprep.subr.mxu0 0.0
        %431 = vmatpush1.msra.mxu0 0.0
        %432 = vmatprep.subr.mxu0 0.0
        %433 = vmatpush1.msra.mxu0 0.0
        %434 = vmatprep.subr.mxu0 0.0
        %435 = vmatpush1.msra.mxu0 0.0
        %436 = vmatprep.subr.mxu0 0.0
        %437 = vmatpush1.msra.mxu0 0.0
        %438 = vmatprep.subr.mxu0 0.0
        %439 = vmatpush1.msra.mxu0 0.0
        %440 = vmatprep.subr.mxu0 0.0
        %441 = vmatpush1.msra.mxu0 0.0
        %442 = vmatprep.subr.mxu0 0.0
        %443 = vmatpush1.msra.mxu0 0.0
        %444 = vmatprep.subr.mxu0 0.0
        %445 = vmatpush1.msra.mxu0 0.0
        %446 = vmatprep.subr.mxu0 0.0
        %447 = vmatpush1.msra.mxu0 %v410
        %448 = vmatprep.subr.mxu0 0.0
        %449 = vmatpush1.msra.mxu0 %v409
        %450 = vmatprep.subr.mxu0 0.0
        %451 = vmatpush1.msra.mxu0 %v408
        %452 = vmatprep.subr.mxu0 0.0
        %453 = vmatpush1.msra.mxu0 %v407
        %454 = vmatprep.subr.mxu0 0.0
        %455 = vmatpush2.msra.mxu0 0.0
        %456 = vmatprep.subr.mxu0 0.0
        %457 = vmatpush2.msra.mxu0 0.0
        %458 = vmatprep.subr.mxu0 0.0
        %459 = vmatpush2.msra.mxu0 0.0
        %460 = vmatprep.subr.mxu0 0.0
        %461 = vmatpush2.msra.mxu0 0.0
        %462 = vmatprep.subr.mxu0 0.0
        %463 = vmatpush2.msra.mxu0 0.0
        %464 = vmatprep.subr.mxu0 0.0
        %465 = vmatpush2.msra.mxu0 0.0
        %466 = vmatprep.subr.mxu0 0.0
        %467 = vmatpush2.msra.mxu0 0.0
        %468 = vmatprep.subr.mxu0 0.0
        %469 = vmatpush2.msra.mxu0 0.0
        %470 = vmatprep.subr.mxu0 0.0
        %471 = vmatpush2.msra.mxu0 0.0
        %472 = vmatprep.subr.mxu0 0.0
        %473 = vmatpush2.msra.mxu0 0.0
        %474 = vmatprep.subr.mxu0 0.0
        %475 = vmatpush2.msra.mxu0 0.0
        %476 = vmatprep.subr.mxu0 0.0
        %477 = vmatpush2.msra.mxu0 0.0
        %478 = vmatprep.subr.mxu0 0.0
        %479 = vmatpush2.msra.mxu0 0.0
        %480 = vmatprep.subr.mxu0 0.0
        %481 = vmatpush2.msra.mxu0 0.0
        %482 = vmatprep.subr.mxu0 0.0
        %483 = vmatpush2.msra.mxu0 0.0
        %484 = vmatprep.subr.mxu0 0.0
        %485 = vmatpush2.msra.mxu0 0.0
        %486 = vmatprep.mubr.f32.mxu0 0.0
        %487 = vmatmul.mubr.f32.gmra.mxu0 %v420
        %v488 = vpop.f32.mrf.mxu0
        %v489 = vadd.f32 %v416, %v488
        %v490 = vpop.f32.mrf.mxu0
        %491 = vdwg.mxu0
        %v492 = vmul.f32 %v489, 0.5
        %v493 = vld [vmem:[#allocation7] sm:$0xff]
        %v494 = vld [vmem:[#allocation7 + $0x8] sm:$0xff]
        %v495 = vld [vmem:[#allocation7 + $0x10] sm:$0xff]
        %v496 = vld [vmem:[#allocation7 + $0x18] sm:$0xff]
        %v497 = vld [vmem:[%s6] sm:$0x1]
        %v499 = vlaneseq
        %v500 = vshrl.u32 %v499, 7
        %v501 = vsub.s32 0, %v500
        %v502 = vrot.slane %v497, %v501
        %504 = vmatprep.subr.mxu0 0.0
        %505 = vmatpush1.msra.mxu0 0.0
        %506 = vmatprep.subr.mxu0 0.0
        %507 = vmatpush1.msra.mxu0 0.0
        %508 = vmatprep.subr.mxu0 0.0
        %509 = vmatpush1.msra.mxu0 0.0
        %510 = vmatprep.subr.mxu0 0.0
        %511 = vmatpush1.msra.mxu0 0.0
        %512 = vmatprep.subr.mxu0 0.0
        %513 = vmatpush1.msra.mxu0 0.0
        %514 = vmatprep.subr.mxu0 0.0
        %515 = vmatpush1.msra.mxu0 0.0
        %516 = vmatprep.subr.mxu0 0.0
        %517 = vmatpush1.msra.mxu0 0.0
        %518 = vmatprep.subr.mxu0 0.0
        %519 = vmatpush1.msra.mxu0 0.0
        %520 = vmatprep.subr.mxu0 0.0
        %521 = vmatpush1.msra.mxu0 0.0
        %522 = vmatprep.subr.mxu0 0.0
        %523 = vmatpush1.msra.mxu0 0.0
        %524 = vmatprep.subr.mxu0 0.0
        %525 = vmatpush1.msra.mxu0 0.0
        %526 = vmatprep.subr.mxu0 0.0
        %527 = vmatpush1.msra.mxu0 0.0
        %528 = vmatprep.subr.mxu0 0.0
        %529 = vmatpush1.msra.mxu0 %v496
        %530 = vmatprep.subr.mxu0 0.0
        %531 = vmatpush1.msra.mxu0 %v495
        %532 = vmatprep.subr.mxu0 0.0
        %533 = vmatpush1.msra.mxu0 %v494
        %534 = vmatprep.subr.mxu0 0.0
        %535 = vmatpush1.msra.mxu0 %v493
        %536 = vmatprep.subr.mxu0 0.0
        %537 = vmatpush2.msra.mxu0 0.0
        %538 = vmatprep.subr.mxu0 0.0
        %539 = vmatpush2.msra.mxu0 0.0
        %540 = vmatprep.subr.mxu0 0.0
        %541 = vmatpush2.msra.mxu0 0.0
        %542 = vmatprep.subr.mxu0 0.0
        %543 = vmatpush2.msra.mxu0 0.0
        %544 = vmatprep.subr.mxu0 0.0
        %545 = vmatpush2.msra.mxu0 0.0
        %546 = vmatprep.subr.mxu0 0.0
        %547 = vmatpush2.msra.mxu0 0.0
        %548 = vmatprep.subr.mxu0 0.0
        %549 = vmatpush2.msra.mxu0 0.0
        %550 = vmatprep.subr.mxu0 0.0
        %551 = vmatpush2.msra.mxu0 0.0
        %552 = vmatprep.subr.mxu0 0.0
        %553 = vmatpush2.msra.mxu0 0.0
        %554 = vmatprep.subr.mxu0 0.0
        %555 = vmatpush2.msra.mxu0 0.0
        %556 = vmatprep.subr.mxu0 0.0
        %557 = vmatpush2.msra.mxu0 0.0
        %558 = vmatprep.subr.mxu0 0.0
        %559 = vmatpush2.msra.mxu0 0.0
        %560 = vmatprep.subr.mxu0 0.0
        %561 = vmatpush2.msra.mxu0 0.0
        %562 = vmatprep.subr.mxu0 0.0
        %563 = vmatpush2.msra.mxu0 0.0
        %564 = vmatprep.subr.mxu0 0.0
        %565 = vmatpush2.msra.mxu0 0.0
        %566 = vmatprep.subr.mxu0 0.0
        %567 = vmatpush2.msra.mxu0 0.0
        %568 = vmatprep.mubr.f32.mxu0 0.0
        %569 = vmatmul.mubr.f32.gmra.mxu0 %v420
        %v570 = vpop.f32.mrf.mxu0
        %v571 = vadd.f32 %v502, %v570
        %v572 = vpop.f32.mrf.mxu0
        %573 = vdwg.mxu0
        %v574 = vld [vmem:[#allocation8] sm:$0xff]
        %v575 = vld [vmem:[#allocation8 + $0x8] sm:$0xff]
        %v576 = vld [vmem:[#allocation8 + $0x10] sm:$0xff]
        %v577 = vld [vmem:[#allocation8 + $0x18] sm:$0xff]
        %v578 = vld [vmem:[%s7] sm:$0x1]
        %v580 = vlaneseq
        %v581 = vshrl.u32 %v580, 7
        %v582 = vsub.s32 0, %v581
        %v583 = vrot.slane %v578, %v582
        %585 = vmatprep.subr.mxu0 0.0
        %586 = vmatpush1.msra.mxu0 0.0
        %587 = vmatprep.subr.mxu0 0.0
        %588 = vmatpush1.msra.mxu0 0.0
        %589 = vmatprep.subr.mxu0 0.0
        %590 = vmatpush1.msra.mxu0 0.0
        %591 = vmatprep.subr.mxu0 0.0
        %592 = vmatpush1.msra.mxu0 0.0
        %593 = vmatprep.subr.mxu0 0.0
        %594 = vmatpush1.msra.mxu0 0.0
        %595 = vmatprep.subr.mxu0 0.0
        %596 = vmatpush1.msra.mxu0 0.0
        %597 = vmatprep.subr.mxu0 0.0
        %598 = vmatpush1.msra.mxu0 0.0
        %599 = vmatprep.subr.mxu0 0.0
        %600 = vmatpush1.msra.mxu0 0.0
        %601 = vmatprep.subr.mxu0 0.0
        %602 = vmatpush1.msra.mxu0 0.0
        %603 = vmatprep.subr.mxu0 0.0
        %604 = vmatpush1.msra.mxu0 0.0
        %605 = vmatprep.subr.mxu0 0.0
        %606 = vmatpush1.msra.mxu0 0.0
        %607 = vmatprep.subr.mxu0 0.0
        %608 = vmatpush1.msra.mxu0 0.0
        %609 = vmatprep.subr.mxu0 0.0
        %610 = vmatpush1.msra.mxu0 %v577
        %611 = vmatprep.subr.mxu0 0.0
        %612 = vmatpush1.msra.mxu0 %v576
        %613 = vmatprep.subr.mxu0 0.0
        %614 = vmatpush1.msra.mxu0 %v575
        %615 = vmatprep.subr.mxu0 0.0
        %616 = vmatpush1.msra.mxu0 %v574
        %617 = vmatprep.subr.mxu0 0.0
        %618 = vmatpush2.msra.mxu0 0.0
        %619 = vmatprep.subr.mxu0 0.0
        %620 = vmatpush2.msra.mxu0 0.0
        %621 = vmatprep.subr.mxu0 0.0
        %622 = vmatpush2.msra.mxu0 0.0
        %623 = vmatprep.subr.mxu0 0.0
        %624 = vmatpush2.msra.mxu0 0.0
        %625 = vmatprep.subr.mxu0 0.0
        %626 = vmatpush2.msra.mxu0 0.0
        %627 = vmatprep.subr.mxu0 0.0
        %628 = vmatpush2.msra.mxu0 0.0
        %629 = vmatprep.subr.mxu0 0.0
        %630 = vmatpush2.msra.mxu0 0.0
        %631 = vmatprep.subr.mxu0 0.0
        %632 = vmatpush2.msra.mxu0 0.0
        %633 = vmatprep.subr.mxu0 0.0
        %634 = vmatpush2.msra.mxu0 0.0
        %635 = vmatprep.subr.mxu0 0.0
        %636 = vmatpush2.msra.mxu0 0.0
        %637 = vmatprep.subr.mxu0 0.0
        %638 = vmatpush2.msra.mxu0 0.0
        %639 = vmatprep.subr.mxu0 0.0
        %640 = vmatpush2.msra.mxu0 0.0
        %641 = vmatprep.subr.mxu0 0.0
        %642 = vmatpush2.msra.mxu0 0.0
        %643 = vmatprep.subr.mxu0 0.0
        %644 = vmatpush2.msra.mxu0 0.0
        %645 = vmatprep.subr.mxu0 0.0
        %646 = vmatpush2.msra.mxu0 0.0
        %647 = vmatprep.subr.mxu0 0.0
        %648 = vmatpush2.msra.mxu0 0.0
        %649 = vmatprep.mubr.f32.mxu0 0.0
        %650 = vmatmul.mubr.f32.gmra.mxu0 %v420
        %v651 = vpop.f32.mrf.mxu0
        %v652 = vadd.f32 %v583, %v651
        %v653 = vpop.f32.mrf.mxu0
        %654 = vdwg.mxu0
        %v655 = vld [vmem:[#allocation10] sm:$0xff]
        %v656 = vld [vmem:[#allocation10 + $0x8] sm:$0xff]
        %v657 = vld [vmem:[#allocation10 + $0x10] sm:$0xff]
        %v658 = vld [vmem:[#allocation10 + $0x18] sm:$0xff]
        %vm659 = vcmask 31744
        %v661 = vsel %vm659, %v492, 0
        %v664 = vsel %vm659, %v571, 0
        %666 = vmatprep.subr.mxu0 0.0
        %667 = vmatpush1.xpose.msra.mxu0 0.0
        %668 = vmatprep.subr.mxu0 0.0
        %669 = vmatpush1.xpose.msra.mxu0 0.0
        %670 = vmatprep.subr.mxu0 0.0
        %671 = vmatpush1.xpose.msra.mxu0 0.0
        %672 = vmatprep.subr.mxu0 0.0
        %673 = vmatpush1.xpose.msra.mxu0 0.0
        %674 = vmatprep.subr.mxu0 0.0
        %675 = vmatpush1.xpose.msra.mxu0 0.0
        %676 = vmatprep.subr.mxu0 0.0
        %677 = vmatpush1.xpose.msra.mxu0 0.0
        %678 = vmatprep.subr.mxu0 0.0
        %679 = vmatpush1.xpose.msra.mxu0 0.0
        %680 = vmatprep.subr.mxu0 0.0
        %681 = vmatpush1.xpose.msra.mxu0 0.0
        %682 = vmatprep.subr.mxu0 0.0
        %683 = vmatpush1.xpose.msra.mxu0 0.0
        %684 = vmatprep.subr.mxu0 0.0
        %685 = vmatpush1.xpose.msra.mxu0 0.0
        %686 = vmatprep.subr.mxu0 0.0
        %687 = vmatpush1.xpose.msra.mxu0 0.0
        %688 = vmatprep.subr.mxu0 0.0
        %689 = vmatpush1.xpose.msra.mxu0 0.0
        %690 = vmatprep.subr.mxu0 0.0
        %691 = vmatpush1.xpose.msra.mxu0 0.0
        %692 = vmatprep.subr.mxu0 0.0
        %693 = vmatpush1.xpose.msra.mxu0 0.0
        %694 = vmatprep.subr.mxu0 0.0
        %695 = vmatpush1.xpose.msra.mxu0 0.0
        %696 = vmatprep.subr.mxu0 0.0
        %697 = vmatpush1.xpose.msra.mxu0 %v664
        %698 = vmatprep.subr.mxu0 0.0
        %699 = vmatpush2.xpose.msra.mxu0 0.0
        %700 = vmatprep.subr.mxu0 0.0
        %701 = vmatpush2.xpose.msra.mxu0 0.0
        %702 = vmatprep.subr.mxu0 0.0
        %703 = vmatpush2.xpose.msra.mxu0 0.0
        %704 = vmatprep.subr.mxu0 0.0
        %705 = vmatpush2.xpose.msra.mxu0 0.0
        %706 = vmatprep.subr.mxu0 0.0
        %707 = vmatpush2.xpose.msra.mxu0 0.0
        %708 = vmatprep.subr.mxu0 0.0
        %709 = vmatpush2.xpose.msra.mxu0 0.0
        %710 = vmatprep.subr.mxu0 0.0
        %711 = vmatpush2.xpose.msra.mxu0 0.0
        %712 = vmatprep.subr.mxu0 0.0
        %713 = vmatpush2.xpose.msra.mxu0 0.0
        %714 = vmatprep.subr.mxu0 0.0
        %715 = vmatpush2.xpose.msra.mxu0 0.0
        %716 = vmatprep.subr.mxu0 0.0
        %717 = vmatpush2.xpose.msra.mxu0 0.0
        %718 = vmatprep.subr.mxu0 0.0
        %719 = vmatpush2.xpose.msra.mxu0 0.0
        %720 = vmatprep.subr.mxu0 0.0
        %721 = vmatpush2.xpose.msra.mxu0 0.0
        %722 = vmatprep.subr.mxu0 0.0
        %723 = vmatpush2.xpose.msra.mxu0 0.0
        %724 = vmatprep.subr.mxu0 0.0
        %725 = vmatpush2.xpose.msra.mxu0 0.0
        %726 = vmatprep.subr.mxu0 0.0
        %727 = vmatpush2.xpose.msra.mxu0 0.0
        %728 = vmatprep.subr.mxu0 0.0
        %729 = vmatpush2.xpose.msra.mxu0 0.0
        %730 = vmatprep.mubr.f32.mxu0 0.0
        %731 = vmatmul.mubr.f32.gmra.mxu0 %v661
        %v732 = vpop.f32.mrf.mxu0
        %v733 = vadd.f32 0.0, %v732
        %v734 = vpop.f32.mrf.mxu0
        %735 = vdwg.mxu0
        %vm736 = vcmask 64512
        %v737 = vsel %vm736, %v733, -inf
        %738 = vmax.xlane.f32.xlu0 %v737
        %v739 = vpop.xlane.xlu0 %738
        %v740 = vsub.f32 %v733, %v739
        %v741 = vmul.f32 %v740, 1.442695
        %v742 = vpow.pop %v741
        %v743 = vsel %vm736, %v742, 0.0
        %744 = vadd.xlane.f32.xlu0 %v743
        %v745 = vpop.xlane.xlu0 %744
        %v747 = vsel %vm736, %v742, 0
        %749 = vmatprep.subr.mxu0 0.0
        %750 = vmatpush1.msra.mxu0 0.0
        %751 = vmatprep.subr.mxu0 0.0
        %752 = vmatpush1.msra.mxu0 0.0
        %753 = vmatprep.subr.mxu0 0.0
        %754 = vmatpush1.msra.mxu0 0.0
        %755 = vmatprep.subr.mxu0 0.0
        %756 = vmatpush1.msra.mxu0 0.0
        %757 = vmatprep.subr.mxu0 0.0
        %758 = vmatpush1.msra.mxu0 0.0
        %759 = vmatprep.subr.mxu0 0.0
        %760 = vmatpush1.msra.mxu0 0.0
        %761 = vmatprep.subr.mxu0 0.0
        %762 = vmatpush1.msra.mxu0 0.0
        %763 = vmatprep.subr.mxu0 0.0
        %764 = vmatpush1.msra.mxu0 0.0
        %765 = vmatprep.subr.mxu0 0.0
        %766 = vmatpush1.msra.mxu0 0.0
        %767 = vmatprep.subr.mxu0 0.0
        %768 = vmatpush1.msra.mxu0 0.0
        %769 = vmatprep.subr.mxu0 0.0
        %770 = vmatpush1.msra.mxu0 0.0
        %771 = vmatprep.subr.mxu0 0.0
        %772 = vmatpush1.msra.mxu0 0.0
        %773 = vmatprep.subr.mxu0 0.0
        %774 = vmatpush1.msra.mxu0 0.0
        %775 = vmatprep.subr.mxu0 0.0
        %776 = vmatpush1.msra.mxu0 0.0
        %777 = vmatprep.subr.mxu0 0.0
        %778 = vmatpush1.msra.mxu0 0.0
        %779 = vmatprep.subr.mxu0 0.0
        %780 = vmatpush1.msra.mxu0 %v652
        %781 = vmatprep.subr.mxu0 0.0
        %782 = vmatpush2.msra.mxu0 0.0
        %783 = vmatprep.subr.mxu0 0.0
        %784 = vmatpush2.msra.mxu0 0.0
        %785 = vmatprep.subr.mxu0 0.0
        %786 = vmatpush2.msra.mxu0 0.0
        %787 = vmatprep.subr.mxu0 0.0
        %788 = vmatpush2.msra.mxu0 0.0
        %789 = vmatprep.subr.mxu0 0.0
        %790 = vmatpush2.msra.mxu0 0.0
        %791 = vmatprep.subr.mxu0 0.0
        %792 = vmatpush2.msra.mxu0 0.0
        %793 = vmatprep.subr.mxu0 0.0
        %794 = vmatpush2.msra.mxu0 0.0
        %795 = vmatprep.subr.mxu0 0.0
        %796 = vmatpush2.msra.mxu0 0.0
        %797 = vmatprep.subr.mxu0 0.0
        %798 = vmatpush2.msra.mxu0 0.0
        %799 = vmatprep.subr.mxu0 0.0
        %800 = vmatpush2.msra.mxu0 0.0
        %801 = vmatprep.subr.mxu0 0.0
        %802 = vmatpush2.msra.mxu0 0.0
        %803 = vmatprep.subr.mxu0 0.0
        %804 = vmatpush2.msra.mxu0 0.0
        %805 = vmatprep.subr.mxu0 0.0
        %806 = vmatpush2.msra.mxu0 0.0
        %807 = vmatprep.subr.mxu0 0.0
        %808 = vmatpush2.msra.mxu0 0.0
        %809 = vmatprep.subr.mxu0 0.0
        %810 = vmatpush2.msra.mxu0 0.0
        %811 = vmatprep.subr.mxu0 0.0
        %812 = vmatpush2.msra.mxu0 0.0
        %813 = vmatprep.mubr.f32.mxu0 0.0
        %814 = vmatmul.mubr.f32.gmra.mxu0 %v747
        %v815 = vpop.f32.mrf.mxu0
        %v816 = vadd.f32 0.0, %v815
        %v817 = vpop.f32.mrf.mxu0
        %818 = vdwg.mxu0
        %v819 = vrcp.pop %v745
        %v820 = vmul.f32 1.0, %v819
        %v821 = vmul.f32 %v816, %v820
        %822 = vrot.lane.b32.xlu0 %v492, 124
        %v823 = vpop.permute.xlu0 %822
        %824 = vrot.lane.b32.xlu0 %v571, 124
        %v825 = vpop.permute.xlu0 %824
        %v826 = vsel %vm659, %v823, 0
        %v828 = vsel %vm659, %v825, 0
        %830 = vmatprep.subr.mxu0 0.0
        %831 = vmatpush1.xpose.msra.mxu0 0.0
        %832 = vmatprep.subr.mxu0 0.0
        %833 = vmatpush1.xpose.msra.mxu0 0.0
        %834 = vmatprep.subr.mxu0 0.0
        %835 = vmatpush1.xpose.msra.mxu0 0.0
        %836 = vmatprep.subr.mxu0 0.0
        %837 = vmatpush1.xpose.msra.mxu0 0.0
        %838 = vmatprep.subr.mxu0 0.0
        %839 = vmatpush1.xpose.msra.mxu0 0.0
        %840 = vmatprep.subr.mxu0 0.0
        %841 = vmatpush1.xpose.msra.mxu0 0.0
        %842 = vmatprep.subr.mxu0 0.0
        %843 = vmatpush1.xpose.msra.mxu0 0.0
        %844 = vmatprep.subr.mxu0 0.0
        %845 = vmatpush1.xpose.msra.mxu0 0.0
        %846 = vmatprep.subr.mxu0 0.0
        %847 = vmatpush1.xpose.msra.mxu0 0.0
        %848 = vmatprep.subr.mxu0 0.0
        %849 = vmatpush1.xpose.msra.mxu0 0.0
        %850 = vmatprep.subr.mxu0 0.0
        %851 = vmatpush1.xpose.msra.mxu0 0.0
        %852 = vmatprep.subr.mxu0 0.0
        %853 = vmatpush1.xpose.msra.mxu0 0.0
        %854 = vmatprep.subr.mxu0 0.0
        %855 = vmatpush1.xpose.msra.mxu0 0.0
        %856 = vmatprep.subr.mxu0 0.0
        %857 = vmatpush1.xpose.msra.mxu0 0.0
        %858 = vmatprep.subr.mxu0 0.0
        %859 = vmatpush1.xpose.msra.mxu0 0.0
        %860 = vmatprep.subr.mxu0 0.0
        %861 = vmatpush1.xpose.msra.mxu0 %v828
        %862 = vmatprep.subr.mxu0 0.0
        %863 = vmatpush2.xpose.msra.mxu0 0.0
        %864 = vmatprep.subr.mxu0 0.0
        %865 = vmatpush2.xpose.msra.mxu0 0.0
        %866 = vmatprep.subr.mxu0 0.0
        %867 = vmatpush2.xpose.msra.mxu0 0.0
        %868 = vmatprep.subr.mxu0 0.0
        %869 = vmatpush2.xpose.msra.mxu0 0.0
        %870 = vmatprep.subr.mxu0 0.0
        %871 = vmatpush2.xpose.msra.mxu0 0.0
        %872 = vmatprep.subr.mxu0 0.0
        %873 = vmatpush2.xpose.msra.mxu0 0.0
        %874 = vmatprep.subr.mxu0 0.0
        %875 = vmatpush2.xpose.msra.mxu0 0.0
        %876 = vmatprep.subr.mxu0 0.0
        %877 = vmatpush2.xpose.msra.mxu0 0.0
        %878 = vmatprep.subr.mxu0 0.0
        %879 = vmatpush2.xpose.msra.mxu0 0.0
        %880 = vmatprep.subr.mxu0 0.0
        %881 = vmatpush2.xpose.msra.mxu0 0.0
        %882 = vmatprep.subr.mxu0 0.0
        %883 = vmatpush2.xpose.msra.mxu0 0.0
        %884 = vmatprep.subr.mxu0 0.0
        %885 = vmatpush2.xpose.msra.mxu0 0.0
        %886 = vmatprep.subr.mxu0 0.0
        %887 = vmatpush2.xpose.msra.mxu0 0.0
        %888 = vmatprep.subr.mxu0 0.0
        %889 = vmatpush2.xpose.msra.mxu0 0.0
        %890 = vmatprep.subr.mxu0 0.0
        %891 = vmatpush2.xpose.msra.mxu0 0.0
        %892 = vmatprep.subr.mxu0 0.0
        %893 = vmatpush2.xpose.msra.mxu0 0.0
        %894 = vmatprep.mubr.f32.mxu0 0.0
        %895 = vmatmul.mubr.f32.gmra.mxu0 %v826
        %v896 = vpop.f32.mrf.mxu0
        %v897 = vadd.f32 0.0, %v896
        %v898 = vpop.f32.mrf.mxu0
        %899 = vdwg.mxu0
        %v900 = vsel %vm736, %v897, -inf
        %901 = vmax.xlane.f32.xlu0 %v900
        %v902 = vpop.xlane.xlu0 %901
        %v903 = vsub.f32 %v897, %v902
        %v904 = vmul.f32 %v903, 1.442695
        %v905 = vpow.pop %v904
        %v906 = vsel %vm736, %v905, 0.0
        %907 = vadd.xlane.f32.xlu0 %v906
        %v908 = vpop.xlane.xlu0 %907
        %910 = vrot.lane.b32.xlu0 %v652, 124
        %v911 = vpop.permute.xlu0 %910
        %v914 = vsel %vm736, %v905, 0
        %916 = vmatprep.subr.mxu0 0.0
        %917 = vmatpush1.msra.mxu0 0.0
        %918 = vmatprep.subr.mxu0 0.0
        %919 = vmatpush1.msra.mxu0 0.0
        %920 = vmatprep.subr.mxu0 0.0
        %921 = vmatpush1.msra.mxu0 0.0
        %922 = vmatprep.subr.mxu0 0.0
        %923 = vmatpush1.msra.mxu0 0.0
        %924 = vmatprep.subr.mxu0 0.0
        %925 = vmatpush1.msra.mxu0 0.0
        %926 = vmatprep.subr.mxu0 0.0
        %927 = vmatpush1.msra.mxu0 0.0
        %928 = vmatprep.subr.mxu0 0.0
        %929 = vmatpush1.msra.mxu0 0.0
        %930 = vmatprep.subr.mxu0 0.0
        %931 = vmatpush1.msra.mxu0 0.0
        %932 = vmatprep.subr.mxu0 0.0
        %933 = vmatpush1.msra.mxu0 0.0
        %934 = vmatprep.subr.mxu0 0.0
        %935 = vmatpush1.msra.mxu0 0.0
        %936 = vmatprep.subr.mxu0 0.0
        %937 = vmatpush1.msra.mxu0 0.0
        %938 = vmatprep.subr.mxu0 0.0
        %939 = vmatpush1.msra.mxu0 0.0
        %940 = vmatprep.subr.mxu0 0.0
        %941 = vmatpush1.msra.mxu0 0.0
        %942 = vmatprep.subr.mxu0 0.0
        %943 = vmatpush1.msra.mxu0 0.0
        %944 = vmatprep.subr.mxu0 0.0
        %945 = vmatpush1.msra.mxu0 0.0
        %946 = vmatprep.subr.mxu0 0.0
        %947 = vmatpush1.msra.mxu0 %v911
        %948 = vmatprep.subr.mxu0 0.0
        %949 = vmatpush2.msra.mxu0 0.0
        %950 = vmatprep.subr.mxu0 0.0
        %951 = vmatpush2.msra.mxu0 0.0
        %952 = vmatprep.subr.mxu0 0.0
        %953 = vmatpush2.msra.mxu0 0.0
        %954 = vmatprep.subr.mxu0 0.0
        %955 = vmatpush2.msra.mxu0 0.0
        %956 = vmatprep.subr.mxu0 0.0
        %957 = vmatpush2.msra.mxu0 0.0
        %958 = vmatprep.subr.mxu0 0.0
        %959 = vmatpush2.msra.mxu0 0.0
        %960 = vmatprep.subr.mxu0 0.0
        %961 = vmatpush2.msra.mxu0 0.0
        %962 = vmatprep.subr.mxu0 0.0
        %963 = vmatpush2.msra.mxu0 0.0
        %964 = vmatprep.subr.mxu0 0.0
        %965 = vmatpush2.msra.mxu0 0.0
        %966 = vmatprep.subr.mxu0 0.0
        %967 = vmatpush2.msra.mxu0 0.0
        %968 = vmatprep.subr.mxu0 0.0
        %969 = vmatpush2.msra.mxu0 0.0
        %970 = vmatprep.subr.mxu0 0.0
        %971 = vmatpush2.msra.mxu0 0.0
        %972 = vmatprep.subr.mxu0 0.0
        %973 = vmatpush2.msra.mxu0 0.0
        %974 = vmatprep.subr.mxu0 0.0
        %975 = vmatpush2.msra.mxu0 0.0
        %976 = vmatprep.subr.mxu0 0.0
        %977 = vmatpush2.msra.mxu0 0.0
        %978 = vmatprep.subr.mxu0 0.0
        %979 = vmatpush2.msra.mxu0 0.0
        %980 = vmatprep.mubr.f32.mxu0 0.0
        %981 = vmatmul.mubr.f32.gmra.mxu0 %v914
        %v982 = vpop.f32.mrf.mxu0
        %v983 = vadd.f32 0.0, %v982
        %v984 = vpop.f32.mrf.mxu0
        %985 = vdwg.mxu0
        %v986 = vrcp.pop %v908
        %v987 = vmul.f32 1.0, %v986
        %v988 = vmul.f32 %v983, %v987
        %v990 = vrot.slane %v655, 4
        %v992 = vsel %vm659, %v988, 0
        %vm994 = vcmask 1043456
        %v995 = vsel %vm994, %v990, 0
        %997 = vmatprep.subr.mxu0 0.0
        %998 = vmatpush1.msra.mxu0 0.0
        %999 = vmatprep.subr.mxu0 0.0
        %1000 = vmatpush1.msra.mxu0 0.0
        %1001 = vmatprep.subr.mxu0 0.0
        %1002 = vmatpush1.msra.mxu0 0.0
        %1003 = vmatprep.subr.mxu0 0.0
        %1004 = vmatpush1.msra.mxu0 0.0
        %1005 = vmatprep.subr.mxu0 0.0
        %1006 = vmatpush1.msra.mxu0 0.0
        %1007 = vmatprep.subr.mxu0 0.0
        %1008 = vmatpush1.msra.mxu0 0.0
        %1009 = vmatprep.subr.mxu0 0.0
        %1010 = vmatpush1.msra.mxu0 0.0
        %1011 = vmatprep.subr.mxu0 0.0
        %1012 = vmatpush1.msra.mxu0 0.0
        %1013 = vmatprep.subr.mxu0 0.0
        %1014 = vmatpush1.msra.mxu0 0.0
        %1015 = vmatprep.subr.mxu0 0.0
        %1016 = vmatpush1.msra.mxu0 0.0
        %1017 = vmatprep.subr.mxu0 0.0
        %1018 = vmatpush1.msra.mxu0 0.0
        %1019 = vmatprep.subr.mxu0 0.0
        %1020 = vmatpush1.msra.mxu0 0.0
        %1021 = vmatprep.subr.mxu0 0.0
        %1022 = vmatpush1.msra.mxu0 0.0
        %1023 = vmatprep.subr.mxu0 0.0
        %1024 = vmatpush1.msra.mxu0 0.0
        %1025 = vmatprep.subr.mxu0 0.0
        %1026 = vmatpush1.msra.mxu0 0.0
        %1027 = vmatprep.subr.mxu0 0.0
        %1028 = vmatpush1.msra.mxu0 %v995
        %1029 = vmatprep.subr.mxu0 0.0
        %1030 = vmatpush2.msra.mxu0 0.0
        %1031 = vmatprep.subr.mxu0 0.0
        %1032 = vmatpush2.msra.mxu0 0.0
        %1033 = vmatprep.subr.mxu0 0.0
        %1034 = vmatpush2.msra.mxu0 0.0
        %1035 = vmatprep.subr.mxu0 0.0
        %1036 = vmatpush2.msra.mxu0 0.0
        %1037 = vmatprep.subr.mxu0 0.0
        %1038 = vmatpush2.msra.mxu0 0.0
        %1039 = vmatprep.subr.mxu0 0.0
        %1040 = vmatpush2.msra.mxu0 0.0
        %1041 = vmatprep.subr.mxu0 0.0
        %1042 = vmatpush2.msra.mxu0 0.0
        %1043 = vmatprep.subr.mxu0 0.0
        %1044 = vmatpush2.msra.mxu0 0.0
        %1045 = vmatprep.subr.mxu0 0.0
        %1046 = vmatpush2.msra.mxu0 0.0
        %1047 = vmatprep.subr.mxu0 0.0
        %1048 = vmatpush2.msra.mxu0 0.0
        %1049 = vmatprep.subr.mxu0 0.0
        %1050 = vmatpush2.msra.mxu0 0.0
        %1051 = vmatprep.subr.mxu0 0.0
        %1052 = vmatpush2.msra.mxu0 0.0
        %1053 = vmatprep.subr.mxu0 0.0
        %1054 = vmatpush2.msra.mxu0 0.0
        %1055 = vmatprep.subr.mxu0 0.0
        %1056 = vmatpush2.msra.mxu0 0.0
        %1057 = vmatprep.subr.mxu0 0.0
        %1058 = vmatpush2.msra.mxu0 0.0
        %1059 = vmatprep.subr.mxu0 0.0
        %1060 = vmatpush2.msra.mxu0 0.0
        %1061 = vmatprep.mubr.f32.mxu0 0.0
        %1062 = vmatmul.mubr.f32.gmra.mxu0 %v992
        %v1063 = vpop.f32.mrf.mxu0
        %v1064 = vadd.f32 0.0, %v1063
        %v1065 = vpop.f32.mrf.mxu0
        %1066 = vdwg.mxu0
        %v1068 = vsel %vm659, %v821, 0
        %v1070 = vsel %vm994, %v655, 0
        %1072 = vmatprep.subr.mxu0 0.0
        %1073 = vmatpush1.msra.mxu0 0.0
        %1074 = vmatprep.subr.mxu0 0.0
        %1075 = vmatpush1.msra.mxu0 0.0
        %1076 = vmatprep.subr.mxu0 0.0
        %1077 = vmatpush1.msra.mxu0 0.0
        %1078 = vmatprep.subr.mxu0 0.0
        %1079 = vmatpush1.msra.mxu0 0.0
        %1080 = vmatprep.subr.mxu0 0.0
        %1081 = vmatpush1.msra.mxu0 0.0
        %1082 = vmatprep.subr.mxu0 0.0
        %1083 = vmatpush1.msra.mxu0 0.0
        %1084 = vmatprep.subr.mxu0 0.0
        %1085 = vmatpush1.msra.mxu0 0.0
        %1086 = vmatprep.subr.mxu0 0.0
        %1087 = vmatpush1.msra.mxu0 0.0
        %1088 = vmatprep.subr.mxu0 0.0
        %1089 = vmatpush1.msra.mxu0 0.0
        %1090 = vmatprep.subr.mxu0 0.0
        %1091 = vmatpush1.msra.mxu0 0.0
        %1092 = vmatprep.subr.mxu0 0.0
        %1093 = vmatpush1.msra.mxu0 0.0
        %1094 = vmatprep.subr.mxu0 0.0
        %1095 = vmatpush1.msra.mxu0 0.0
        %1096 = vmatprep.subr.mxu0 0.0
        %1097 = vmatpush1.msra.mxu0 0.0
        %1098 = vmatprep.subr.mxu0 0.0
        %1099 = vmatpush1.msra.mxu0 0.0
        %1100 = vmatprep.subr.mxu0 0.0
        %1101 = vmatpush1.msra.mxu0 0.0
        %1102 = vmatprep.subr.mxu0 0.0
        %1103 = vmatpush1.msra.mxu0 %v1070
        %1104 = vmatprep.subr.mxu0 0.0
        %1105 = vmatpush2.msra.mxu0 0.0
        %1106 = vmatprep.subr.mxu0 0.0
        %1107 = vmatpush2.msra.mxu0 0.0
        %1108 = vmatprep.subr.mxu0 0.0
        %1109 = vmatpush2.msra.mxu0 0.0
        %1110 = vmatprep.subr.mxu0 0.0
        %1111 = vmatpush2.msra.mxu0 0.0
        %1112 = vmatprep.subr.mxu0 0.0
        %1113 = vmatpush2.msra.mxu0 0.0
        %1114 = vmatprep.subr.mxu0 0.0
        %1115 = vmatpush2.msra.mxu0 0.0
        %1116 = vmatprep.subr.mxu0 0.0
        %1117 = vmatpush2.msra.mxu0 0.0
        %1118 = vmatprep.subr.mxu0 0.0
        %1119 = vmatpush2.msra.mxu0 0.0
        %1120 = vmatprep.subr.mxu0 0.0
        %1121 = vmatpush2.msra.mxu0 0.0
        %1122 = vmatprep.subr.mxu0 0.0
        %1123 = vmatpush2.msra.mxu0 0.0
        %1124 = vmatprep.subr.mxu0 0.0
        %1125 = vmatpush2.msra.mxu0 0.0
        %1126 = vmatprep.subr.mxu0 0.0
        %1127 = vmatpush2.msra.mxu0 0.0
        %1128 = vmatprep.subr.mxu0 0.0
        %1129 = vmatpush2.msra.mxu0 0.0
        %1130 = vmatprep.subr.mxu0 0.0
        %1131 = vmatpush2.msra.mxu0 0.0
        %1132 = vmatprep.subr.mxu0 0.0
        %1133 = vmatpush2.msra.mxu0 0.0
        %1134 = vmatprep.subr.mxu0 0.0
        %1135 = vmatpush2.msra.mxu0 0.0
        %1136 = vmatprep.mubr.f32.mxu0 0.0
        %1137 = vmatmul.mubr.f32.gmra.mxu0 %v1068
        %v1138 = vpop.f32.mrf.mxu0
        %v1139 = vadd.f32 %v1064, %v1138
        %v1140 = vpop.f32.mrf.mxu0
        %1141 = vdwg.mxu0
        %1142 = vrot.lane.b32.xlu0 %v492, 120
        %v1143 = vpop.permute.xlu0 %1142
        %1144 = vrot.lane.b32.xlu0 %v571, 120
        %v1145 = vpop.permute.xlu0 %1144
        %v1146 = vsel %vm659, %v1143, 0
        %v1148 = vsel %vm659, %v1145, 0
        %1150 = vmatprep.subr.mxu0 0.0
        %1151 = vmatpush1.xpose.msra.mxu0 0.0
        %1152 = vmatprep.subr.mxu0 0.0
        %1153 = vmatpush1.xpose.msra.mxu0 0.0
        %1154 = vmatprep.subr.mxu0 0.0
        %1155 = vmatpush1.xpose.msra.mxu0 0.0
        %1156 = vmatprep.subr.mxu0 0.0
        %1157 = vmatpush1.xpose.msra.mxu0 0.0
        %1158 = vmatprep.subr.mxu0 0.0
        %1159 = vmatpush1.xpose.msra.mxu0 0.0
        %1160 = vmatprep.subr.mxu0 0.0
        %1161 = vmatpush1.xpose.msra.mxu0 0.0
        %1162 = vmatprep.subr.mxu0 0.0
        %1163 = vmatpush1.xpose.msra.mxu0 0.0
        %1164 = vmatprep.subr.mxu0 0.0
        %1165 = vmatpush1.xpose.msra.mxu0 0.0
        %1166 = vmatprep.subr.mxu0 0.0
        %1167 = vmatpush1.xpose.msra.mxu0 0.0
        %1168 = vmatprep.subr.mxu0 0.0
        %1169 = vmatpush1.xpose.msra.mxu0 0.0
        %1170 = vmatprep.subr.mxu0 0.0
        %1171 = vmatpush1.xpose.msra.mxu0 0.0
        %1172 = vmatprep.subr.mxu0 0.0
        %1173 = vmatpush1.xpose.msra.mxu0 0.0
        %1174 = vmatprep.subr.mxu0 0.0
        %1175 = vmatpush1.xpose.msra.mxu0 0.0
        %1176 = vmatprep.subr.mxu0 0.0
        %1177 = vmatpush1.xpose.msra.mxu0 0.0
        %1178 = vmatprep.subr.mxu0 0.0
        %1179 = vmatpush1.xpose.msra.mxu0 0.0
        %1180 = vmatprep.subr.mxu0 0.0
        %1181 = vmatpush1.xpose.msra.mxu0 %v1148
        %1182 = vmatprep.subr.mxu0 0.0
        %1183 = vmatpush2.xpose.msra.mxu0 0.0
        %1184 = vmatprep.subr.mxu0 0.0
        %1185 = vmatpush2.xpose.msra.mxu0 0.0
        %1186 = vmatprep.subr.mxu0 0.0
        %1187 = vmatpush2.xpose.msra.mxu0 0.0
        %1188 = vmatprep.subr.mxu0 0.0
        %1189 = vmatpush2.xpose.msra.mxu0 0.0
        %1190 = vmatprep.subr.mxu0 0.0
        %1191 = vmatpush2.xpose.msra.mxu0 0.0
        %1192 = vmatprep.subr.mxu0 0.0
        %1193 = vmatpush2.xpose.msra.mxu0 0.0
        %1194 = vmatprep.subr.mxu0 0.0
        %1195 = vmatpush2.xpose.msra.mxu0 0.0
        %1196 = vmatprep.subr.mxu0 0.0
        %1197 = vmatpush2.xpose.msra.mxu0 0.0
        %1198 = vmatprep.subr.mxu0 0.0
        %1199 = vmatpush2.xpose.msra.mxu0 0.0
        %1200 = vmatprep.subr.mxu0 0.0
        %1201 = vmatpush2.xpose.msra.mxu0 0.0
        %1202 = vmatprep.subr.mxu0 0.0
        %1203 = vmatpush2.xpose.msra.mxu0 0.0
        %1204 = vmatprep.subr.mxu0 0.0
        %1205 = vmatpush2.xpose.msra.mxu0 0.0
        %1206 = vmatprep.subr.mxu0 0.0
        %1207 = vmatpush2.xpose.msra.mxu0 0.0
        %1208 = vmatprep.subr.mxu0 0.0
        %1209 = vmatpush2.xpose.msra.mxu0 0.0
        %1210 = vmatprep.subr.mxu0 0.0
        %1211 = vmatpush2.xpose.msra.mxu0 0.0
        %1212 = vmatprep.subr.mxu0 0.0
        %1213 = vmatpush2.xpose.msra.mxu0 0.0
        %1214 = vmatprep.mubr.f32.mxu0 0.0
        %1215 = vmatmul.mubr.f32.gmra.mxu0 %v1146
        %v1216 = vpop.f32.mrf.mxu0
        %v1217 = vadd.f32 0.0, %v1216
        %v1218 = vpop.f32.mrf.mxu0
        %1219 = vdwg.mxu0
        %v1220 = vsel %vm736, %v1217, -inf
        %1221 = vmax.xlane.f32.xlu0 %v1220
        %v1222 = vpop.xlane.xlu0 %1221
        %v1223 = vsub.f32 %v1217, %v1222
        %v1224 = vmul.f32 %v1223, 1.442695
        %v1225 = vpow.pop %v1224
        %v1226 = vsel %vm736, %v1225, 0.0
        %1227 = vadd.xlane.f32.xlu0 %v1226
        %v1228 = vpop.xlane.xlu0 %1227
        %1229 = vrot.lane.b32.xlu0 %v652, 120
        %v1230 = vpop.permute.xlu0 %1229
        %v1233 = vsel %vm736, %v1225, 0
        %1235 = vmatprep.subr.mxu0 0.0
        %1236 = vmatpush1.msra.mxu0 0.0
        %1237 = vmatprep.subr.mxu0 0.0
        %1238 = vmatpush1.msra.mxu0 0.0
        %1239 = vmatprep.subr.mxu0 0.0
        %1240 = vmatpush1.msra.mxu0 0.0
        %1241 = vmatprep.subr.mxu0 0.0
        %1242 = vmatpush1.msra.mxu0 0.0
        %1243 = vmatprep.subr.mxu0 0.0
        %1244 = vmatpush1.msra.mxu0 0.0
        %1245 = vmatprep.subr.mxu0 0.0
        %1246 = vmatpush1.msra.mxu0 0.0
        %1247 = vmatprep.subr.mxu0 0.0
        %1248 = vmatpush1.msra.mxu0 0.0
        %1249 = vmatprep.subr.mxu0 0.0
        %1250 = vmatpush1.msra.mxu0 0.0
        %1251 = vmatprep.subr.mxu0 0.0
        %1252 = vmatpush1.msra.mxu0 0.0
        %1253 = vmatprep.subr.mxu0 0.0
        %1254 = vmatpush1.msra.mxu0 0.0
        %1255 = vmatprep.subr.mxu0 0.0
        %1256 = vmatpush1.msra.mxu0 0.0
        %1257 = vmatprep.subr.mxu0 0.0
        %1258 = vmatpush1.msra.mxu0 0.0
        %1259 = vmatprep.subr.mxu0 0.0
        %1260 = vmatpush1.msra.mxu0 0.0
        %1261 = vmatprep.subr.mxu0 0.0
        %1262 = vmatpush1.msra.mxu0 0.0
        %1263 = vmatprep.subr.mxu0 0.0
        %1264 = vmatpush1.msra.mxu0 0.0
        %1265 = vmatprep.subr.mxu0 0.0
        %1266 = vmatpush1.msra.mxu0 %v1230
        %1267 = vmatprep.subr.mxu0 0.0
        %1268 = vmatpush2.msra.mxu0 0.0
        %1269 = vmatprep.subr.mxu0 0.0
        %1270 = vmatpush2.msra.mxu0 0.0
        %1271 = vmatprep.subr.mxu0 0.0
        %1272 = vmatpush2.msra.mxu0 0.0
        %1273 = vmatprep.subr.mxu0 0.0
        %1274 = vmatpush2.msra.mxu0 0.0
        %1275 = vmatprep.subr.mxu0 0.0
        %1276 = vmatpush2.msra.mxu0 0.0
        %1277 = vmatprep.subr.mxu0 0.0
        %1278 = vmatpush2.msra.mxu0 0.0
        %1279 = vmatprep.subr.mxu0 0.0
        %1280 = vmatpush2.msra.mxu0 0.0
        %1281 = vmatprep.subr.mxu0 0.0
        %1282 = vmatpush2.msra.mxu0 0.0
        %1283 = vmatprep.subr.mxu0 0.0
        %1284 = vmatpush2.msra.mxu0 0.0
        %1285 = vmatprep.subr.mxu0 0.0
        %1286 = vmatpush2.msra.mxu0 0.0
        %1287 = vmatprep.subr.mxu0 0.0
        %1288 = vmatpush2.msra.mxu0 0.0
        %1289 = vmatprep.subr.mxu0 0.0
        %1290 = vmatpush2.msra.mxu0 0.0
        %1291 = vmatprep.subr.mxu0 0.0
        %1292 = vmatpush2.msra.mxu0 0.0
        %1293 = vmatprep.subr.mxu0 0.0
        %1294 = vmatpush2.msra.mxu0 0.0
        %1295 = vmatprep.subr.mxu0 0.0
        %1296 = vmatpush2.msra.mxu0 0.0
        %1297 = vmatprep.subr.mxu0 0.0
        %1298 = vmatpush2.msra.mxu0 0.0
        %1299 = vmatprep.mubr.f32.mxu0 0.0
        %1300 = vmatmul.mubr.f32.gmra.mxu0 %v1233
        %v1301 = vpop.f32.mrf.mxu0
        %v1302 = vadd.f32 0.0, %v1301
        %v1303 = vpop.f32.mrf.mxu0
        %1304 = vdwg.mxu0
        %v1305 = vrcp.pop %v1228
        %v1306 = vmul.f32 1.0, %v1305
        %v1307 = vmul.f32 %v1302, %v1306
        %v1309 = vsel %vm659, %v1307, 0
        %v1312 = vsel %vm994, %v656, 0
        %1314 = vmatprep.subr.mxu0 0.0
        %1315 = vmatpush1.msra.mxu0 0.0
        %1316 = vmatprep.subr.mxu0 0.0
        %1317 = vmatpush1.msra.mxu0 0.0
        %1318 = vmatprep.subr.mxu0 0.0
        %1319 = vmatpush1.msra.mxu0 0.0
        %1320 = vmatprep.subr.mxu0 0.0
        %1321 = vmatpush1.msra.mxu0 0.0
        %1322 = vmatprep.subr.mxu0 0.0
        %1323 = vmatpush1.msra.mxu0 0.0
        %1324 = vmatprep.subr.mxu0 0.0
        %1325 = vmatpush1.msra.mxu0 0.0
        %1326 = vmatprep.subr.mxu0 0.0
        %1327 = vmatpush1.msra.mxu0 0.0
        %1328 = vmatprep.subr.mxu0 0.0
        %1329 = vmatpush1.msra.mxu0 0.0
        %1330 = vmatprep.subr.mxu0 0.0
        %1331 = vmatpush1.msra.mxu0 0.0
        %1332 = vmatprep.subr.mxu0 0.0
        %1333 = vmatpush1.msra.mxu0 0.0
        %1334 = vmatprep.subr.mxu0 0.0
        %1335 = vmatpush1.msra.mxu0 0.0
        %1336 = vmatprep.subr.mxu0 0.0
        %1337 = vmatpush1.msra.mxu0 0.0
        %1338 = vmatprep.subr.mxu0 0.0
        %1339 = vmatpush1.msra.mxu0 0.0
        %1340 = vmatprep.subr.mxu0 0.0
        %1341 = vmatpush1.msra.mxu0 0.0
        %1342 = vmatprep.subr.mxu0 0.0
        %1343 = vmatpush1.msra.mxu0 0.0
        %1344 = vmatprep.subr.mxu0 0.0
        %1345 = vmatpush1.msra.mxu0 %v1312
        %1346 = vmatprep.subr.mxu0 0.0
        %1347 = vmatpush2.msra.mxu0 0.0
        %1348 = vmatprep.subr.mxu0 0.0
        %1349 = vmatpush2.msra.mxu0 0.0
        %1350 = vmatprep.subr.mxu0 0.0
        %1351 = vmatpush2.msra.mxu0 0.0
        %1352 = vmatprep.subr.mxu0 0.0
        %1353 = vmatpush2.msra.mxu0 0.0
        %1354 = vmatprep.subr.mxu0 0.0
        %1355 = vmatpush2.msra.mxu0 0.0
        %1356 = vmatprep.subr.mxu0 0.0
        %1357 = vmatpush2.msra.mxu0 0.0
        %1358 = vmatprep.subr.mxu0 0.0
        %1359 = vmatpush2.msra.mxu0 0.0
        %1360 = vmatprep.subr.mxu0 0.0
        %1361 = vmatpush2.msra.mxu0 0.0
        %1362 = vmatprep.subr.mxu0 0.0
        %1363 = vmatpush2.msra.mxu0 0.0
        %1364 = vmatprep.subr.mxu0 0.0
        %1365 = vmatpush2.msra.mxu0 0.0
        %1366 = vmatprep.subr.mxu0 0.0
        %1367 = vmatpush2.msra.mxu0 0.0
        %1368 = vmatprep.subr.mxu0 0.0
        %1369 = vmatpush2.msra.mxu0 0.0
        %1370 = vmatprep.subr.mxu0 0.0
        %1371 = vmatpush2.msra.mxu0 0.0
        %1372 = vmatprep.subr.mxu0 0.0
        %1373 = vmatpush2.msra.mxu0 0.0
        %1374 = vmatprep.subr.mxu0 0.0
        %1375 = vmatpush2.msra.mxu0 0.0
        %1376 = vmatprep.subr.mxu0 0.0
        %1377 = vmatpush2.msra.mxu0 0.0
        %1378 = vmatprep.mubr.f32.mxu0 0.0
        %1379 = vmatmul.mubr.f32.gmra.mxu0 %v1309
        %v1380 = vpop.f32.mrf.mxu0
        %v1381 = vadd.f32 0.0, %v1380
        %v1382 = vpop.f32.mrf.mxu0
        %1383 = vdwg.mxu0
        %v1384 = vadd.f32 %v1139, %v1381
        %1385 = vrot.lane.b32.xlu0 %v492, 116
        %v1386 = vpop.permute.xlu0 %1385
        %1387 = vrot.lane.b32.xlu0 %v571, 116
        %v1388 = vpop.permute.xlu0 %1387
        %v1389 = vsel %vm659, %v1386, 0
        %v1391 = vsel %vm659, %v1388, 0
        %1393 = vmatprep.subr.mxu0 0.0
        %1394 = vmatpush1.xpose.msra.mxu0 0.0
        %1395 = vmatprep.subr.mxu0 0.0
        %1396 = vmatpush1.xpose.msra.mxu0 0.0
        %1397 = vmatprep.subr.mxu0 0.0
        %1398 = vmatpush1.xpose.msra.mxu0 0.0
        %1399 = vmatprep.subr.mxu0 0.0
        %1400 = vmatpush1.xpose.msra.mxu0 0.0
        %1401 = vmatprep.subr.mxu0 0.0
        %1402 = vmatpush1.xpose.msra.mxu0 0.0
        %1403 = vmatprep.subr.mxu0 0.0
        %1404 = vmatpush1.xpose.msra.mxu0 0.0
        %1405 = vmatprep.subr.mxu0 0.0
        %1406 = vmatpush1.xpose.msra.mxu0 0.0
        %1407 = vmatprep.subr.mxu0 0.0
        %1408 = vmatpush1.xpose.msra.mxu0 0.0
        %1409 = vmatprep.subr.mxu0 0.0
        %1410 = vmatpush1.xpose.msra.mxu0 0.0
        %1411 = vmatprep.subr.mxu0 0.0
        %1412 = vmatpush1.xpose.msra.mxu0 0.0
        %1413 = vmatprep.subr.mxu0 0.0
        %1414 = vmatpush1.xpose.msra.mxu0 0.0
        %1415 = vmatprep.subr.mxu0 0.0
        %1416 = vmatpush1.xpose.msra.mxu0 0.0
        %1417 = vmatprep.subr.mxu0 0.0
        %1418 = vmatpush1.xpose.msra.mxu0 0.0
        %1419 = vmatprep.subr.mxu0 0.0
        %1420 = vmatpush1.xpose.msra.mxu0 0.0
        %1421 = vmatprep.subr.mxu0 0.0
        %1422 = vmatpush1.xpose.msra.mxu0 0.0
        %1423 = vmatprep.subr.mxu0 0.0
        %1424 = vmatpush1.xpose.msra.mxu0 %v1391
        %1425 = vmatprep.subr.mxu0 0.0
        %1426 = vmatpush2.xpose.msra.mxu0 0.0
        %1427 = vmatprep.subr.mxu0 0.0
        %1428 = vmatpush2.xpose.msra.mxu0 0.0
        %1429 = vmatprep.subr.mxu0 0.0
        %1430 = vmatpush2.xpose.msra.mxu0 0.0
        %1431 = vmatprep.subr.mxu0 0.0
        %1432 = vmatpush2.xpose.msra.mxu0 0.0
        %1433 = vmatprep.subr.mxu0 0.0
        %1434 = vmatpush2.xpose.msra.mxu0 0.0
        %1435 = vmatprep.subr.mxu0 0.0
        %1436 = vmatpush2.xpose.msra.mxu0 0.0
        %1437 = vmatprep.subr.mxu0 0.0
        %1438 = vmatpush2.xpose.msra.mxu0 0.0
        %1439 = vmatprep.subr.mxu0 0.0
        %1440 = vmatpush2.xpose.msra.mxu0 0.0
        %1441 = vmatprep.subr.mxu0 0.0
        %1442 = vmatpush2.xpose.msra.mxu0 0.0
        %1443 = vmatprep.subr.mxu0 0.0
        %1444 = vmatpush2.xpose.msra.mxu0 0.0
        %1445 = vmatprep.subr.mxu0 0.0
        %1446 = vmatpush2.xpose.msra.mxu0 0.0
        %1447 = vmatprep.subr.mxu0 0.0
        %1448 = vmatpush2.xpose.msra.mxu0 0.0
        %1449 = vmatprep.subr.mxu0 0.0
        %1450 = vmatpush2.xpose.msra.mxu0 0.0
        %1451 = vmatprep.subr.mxu0 0.0
        %1452 = vmatpush2.xpose.msra.mxu0 0.0
        %1453 = vmatprep.subr.mxu0 0.0
        %1454 = vmatpush2.xpose.msra.mxu0 0.0
        %1455 = vmatprep.subr.mxu0 0.0
        %1456 = vmatpush2.xpose.msra.mxu0 0.0
        %1457 = vmatprep.mubr.f32.mxu0 0.0
        %1458 = vmatmul.mubr.f32.gmra.mxu0 %v1389
        %v1459 = vpop.f32.mrf.mxu0
        %v1460 = vadd.f32 0.0, %v1459
        %v1461 = vpop.f32.mrf.mxu0
        %1462 = vdwg.mxu0
        %v1463 = vsel %vm736, %v1460, -inf
        %1464 = vmax.xlane.f32.xlu0 %v1463
        %v1465 = vpop.xlane.xlu0 %1464
        %v1466 = vsub.f32 %v1460, %v1465
        %v1467 = vmul.f32 %v1466, 1.442695
        %v1468 = vpow.pop %v1467
        %v1469 = vsel %vm736, %v1468, 0.0
        %1470 = vadd.xlane.f32.xlu0 %v1469
        %v1471 = vpop.xlane.xlu0 %1470
        %1472 = vrot.lane.b32.xlu0 %v652, 116
        %v1473 = vpop.permute.xlu0 %1472
        %v1476 = vsel %vm736, %v1468, 0
        %1478 = vmatprep.subr.mxu0 0.0
        %1479 = vmatpush1.msra.mxu0 0.0
        %1480 = vmatprep.subr.mxu0 0.0
        %1481 = vmatpush1.msra.mxu0 0.0
        %1482 = vmatprep.subr.mxu0 0.0
        %1483 = vmatpush1.msra.mxu0 0.0
        %1484 = vmatprep.subr.mxu0 0.0
        %1485 = vmatpush1.msra.mxu0 0.0
        %1486 = vmatprep.subr.mxu0 0.0
        %1487 = vmatpush1.msra.mxu0 0.0
        %1488 = vmatprep.subr.mxu0 0.0
        %1489 = vmatpush1.msra.mxu0 0.0
        %1490 = vmatprep.subr.mxu0 0.0
        %1491 = vmatpush1.msra.mxu0 0.0
        %1492 = vmatprep.subr.mxu0 0.0
        %1493 = vmatpush1.msra.mxu0 0.0
        %1494 = vmatprep.subr.mxu0 0.0
        %1495 = vmatpush1.msra.mxu0 0.0
        %1496 = vmatprep.subr.mxu0 0.0
        %1497 = vmatpush1.msra.mxu0 0.0
        %1498 = vmatprep.subr.mxu0 0.0
        %1499 = vmatpush1.msra.mxu0 0.0
        %1500 = vmatprep.subr.mxu0 0.0
        %1501 = vmatpush1.msra.mxu0 0.0
        %1502 = vmatprep.subr.mxu0 0.0
        %1503 = vmatpush1.msra.mxu0 0.0
        %1504 = vmatprep.subr.mxu0 0.0
        %1505 = vmatpush1.msra.mxu0 0.0
        %1506 = vmatprep.subr.mxu0 0.0
        %1507 = vmatpush1.msra.mxu0 0.0
        %1508 = vmatprep.subr.mxu0 0.0
        %1509 = vmatpush1.msra.mxu0 %v1473
        %1510 = vmatprep.subr.mxu0 0.0
        %1511 = vmatpush2.msra.mxu0 0.0
        %1512 = vmatprep.subr.mxu0 0.0
        %1513 = vmatpush2.msra.mxu0 0.0
        %1514 = vmatprep.subr.mxu0 0.0
        %1515 = vmatpush2.msra.mxu0 0.0
        %1516 = vmatprep.subr.mxu0 0.0
        %1517 = vmatpush2.msra.mxu0 0.0
        %1518 = vmatprep.subr.mxu0 0.0
        %1519 = vmatpush2.msra.mxu0 0.0
        %1520 = vmatprep.subr.mxu0 0.0
        %1521 = vmatpush2.msra.mxu0 0.0
        %1522 = vmatprep.subr.mxu0 0.0
        %1523 = vmatpush2.msra.mxu0 0.0
        %1524 = vmatprep.subr.mxu0 0.0
        %1525 = vmatpush2.msra.mxu0 0.0
        %1526 = vmatprep.subr.mxu0 0.0
        %1527 = vmatpush2.msra.mxu0 0.0
        %1528 = vmatprep.subr.mxu0 0.0
        %1529 = vmatpush2.msra.mxu0 0.0
        %1530 = vmatprep.subr.mxu0 0.0
        %1531 = vmatpush2.msra.mxu0 0.0
        %1532 = vmatprep.subr.mxu0 0.0
        %1533 = vmatpush2.msra.mxu0 0.0
        %1534 = vmatprep.subr.mxu0 0.0
        %1535 = vmatpush2.msra.mxu0 0.0
        %1536 = vmatprep.subr.mxu0 0.0
        %1537 = vmatpush2.msra.mxu0 0.0
        %1538 = vmatprep.subr.mxu0 0.0
        %1539 = vmatpush2.msra.mxu0 0.0
        %1540 = vmatprep.subr.mxu0 0.0
        %1541 = vmatpush2.msra.mxu0 0.0
        %1542 = vmatprep.mubr.f32.mxu0 0.0
        %1543 = vmatmul.mubr.f32.gmra.mxu0 %v1476
        %v1544 = vpop.f32.mrf.mxu0
        %v1545 = vadd.f32 0.0, %v1544
        %v1546 = vpop.f32.mrf.mxu0
        %1547 = vdwg.mxu0
        %v1548 = vrcp.pop %v1471
        %v1549 = vmul.f32 1.0, %v1548
        %v1550 = vmul.f32 %v1545, %v1549
        %v1551 = vrot.slane %v656, 4
        %v1553 = vsel %vm659, %v1550, 0
        %v1555 = vsel %vm994, %v1551, 0
        %1557 = vmatprep.subr.mxu0 0.0
        %1558 = vmatpush1.msra.mxu0 0.0
        %1559 = vmatprep.subr.mxu0 0.0
        %1560 = vmatpush1.msra.mxu0 0.0
        %1561 = vmatprep.subr.mxu0 0.0
        %1562 = vmatpush1.msra.mxu0 0.0
        %1563 = vmatprep.subr.mxu0 0.0
        %1564 = vmatpush1.msra.mxu0 0.0
        %1565 = vmatprep.subr.mxu0 0.0
        %1566 = vmatpush1.msra.mxu0 0.0
        %1567 = vmatprep.subr.mxu0 0.0
        %1568 = vmatpush1.msra.mxu0 0.0
        %1569 = vmatprep.subr.mxu0 0.0
        %1570 = vmatpush1.msra.mxu0 0.0
        %1571 = vmatprep.subr.mxu0 0.0
        %1572 = vmatpush1.msra.mxu0 0.0
        %1573 = vmatprep.subr.mxu0 0.0
        %1574 = vmatpush1.msra.mxu0 0.0
        %1575 = vmatprep.subr.mxu0 0.0
        %1576 = vmatpush1.msra.mxu0 0.0
        %1577 = vmatprep.subr.mxu0 0.0
        %1578 = vmatpush1.msra.mxu0 0.0
        %1579 = vmatprep.subr.mxu0 0.0
        %1580 = vmatpush1.msra.mxu0 0.0
        %1581 = vmatprep.subr.mxu0 0.0
        %1582 = vmatpush1.msra.mxu0 0.0
        %1583 = vmatprep.subr.mxu0 0.0
        %1584 = vmatpush1.msra.mxu0 0.0
        %1585 = vmatprep.subr.mxu0 0.0
        %1586 = vmatpush1.msra.mxu0 0.0
        %1587 = vmatprep.subr.mxu0 0.0
        %1588 = vmatpush1.msra.mxu0 %v1555
        %1589 = vmatprep.subr.mxu0 0.0
        %1590 = vmatpush2.msra.mxu0 0.0
        %1591 = vmatprep.subr.mxu0 0.0
        %1592 = vmatpush2.msra.mxu0 0.0
        %1593 = vmatprep.subr.mxu0 0.0
        %1594 = vmatpush2.msra.mxu0 0.0
        %1595 = vmatprep.subr.mxu0 0.0
        %1596 = vmatpush2.msra.mxu0 0.0
        %1597 = vmatprep.subr.mxu0 0.0
        %1598 = vmatpush2.msra.mxu0 0.0
        %1599 = vmatprep.subr.mxu0 0.0
        %1600 = vmatpush2.msra.mxu0 0.0
        %1601 = vmatprep.subr.mxu0 0.0
        %1602 = vmatpush2.msra.mxu0 0.0
        %1603 = vmatprep.subr.mxu0 0.0
        %1604 = vmatpush2.msra.mxu0 0.0
        %1605 = vmatprep.subr.mxu0 0.0
        %1606 = vmatpush2.msra.mxu0 0.0
        %1607 = vmatprep.subr.mxu0 0.0
        %1608 = vmatpush2.msra.mxu0 0.0
        %1609 = vmatprep.subr.mxu0 0.0
        %1610 = vmatpush2.msra.mxu0 0.0
        %1611 = vmatprep.subr.mxu0 0.0
        %1612 = vmatpush2.msra.mxu0 0.0
        %1613 = vmatprep.subr.mxu0 0.0
        %1614 = vmatpush2.msra.mxu0 0.0
        %1615 = vmatprep.subr.mxu0 0.0
        %1616 = vmatpush2.msra.mxu0 0.0
        %1617 = vmatprep.subr.mxu0 0.0
        %1618 = vmatpush2.msra.mxu0 0.0
        %1619 = vmatprep.subr.mxu0 0.0
        %1620 = vmatpush2.msra.mxu0 0.0
        %1621 = vmatprep.mubr.f32.mxu0 0.0
        %1622 = vmatmul.mubr.f32.gmra.mxu0 %v1553
        %v1623 = vpop.f32.mrf.mxu0
        %v1624 = vadd.f32 0.0, %v1623
        %v1625 = vpop.f32.mrf.mxu0
        %1626 = vdwg.mxu0
        %v1627 = vadd.f32 %v1384, %v1624
        %1628 = vrot.lane.b32.xlu0 %v492, 112
        %v1629 = vpop.permute.xlu0 %1628
        %1630 = vrot.lane.b32.xlu0 %v571, 112
        %v1631 = vpop.permute.xlu0 %1630
        %v1632 = vsel %vm659, %v1629, 0
        %v1634 = vsel %vm659, %v1631, 0
        %1636 = vmatprep.subr.mxu0 0.0
        %1637 = vmatpush1.xpose.msra.mxu0 0.0
        %1638 = vmatprep.subr.mxu0 0.0
        %1639 = vmatpush1.xpose.msra.mxu0 0.0
        %1640 = vmatprep.subr.mxu0 0.0
        %1641 = vmatpush1.xpose.msra.mxu0 0.0
        %1642 = vmatprep.subr.mxu0 0.0
        %1643 = vmatpush1.xpose.msra.mxu0 0.0
        %1644 = vmatprep.subr.mxu0 0.0
        %1645 = vmatpush1.xpose.msra.mxu0 0.0
        %1646 = vmatprep.subr.mxu0 0.0
        %1647 = vmatpush1.xpose.msra.mxu0 0.0
        %1648 = vmatprep.subr.mxu0 0.0
        %1649 = vmatpush1.xpose.msra.mxu0 0.0
        %1650 = vmatprep.subr.mxu0 0.0
        %1651 = vmatpush1.xpose.msra.mxu0 0.0
        %1652 = vmatprep.subr.mxu0 0.0
        %1653 = vmatpush1.xpose.msra.mxu0 0.0
        %1654 = vmatprep.subr.mxu0 0.0
        %1655 = vmatpush1.xpose.msra.mxu0 0.0
        %1656 = vmatprep.subr.mxu0 0.0
        %1657 = vmatpush1.xpose.msra.mxu0 0.0
        %1658 = vmatprep.subr.mxu0 0.0
        %1659 = vmatpush1.xpose.msra.mxu0 0.0
        %1660 = vmatprep.subr.mxu0 0.0
        %1661 = vmatpush1.xpose.msra.mxu0 0.0
        %1662 = vmatprep.subr.mxu0 0.0
        %1663 = vmatpush1.xpose.msra.mxu0 0.0
        %1664 = vmatprep.subr.mxu0 0.0
        %1665 = vmatpush1.xpose.msra.mxu0 0.0
        %1666 = vmatprep.subr.mxu0 0.0
        %1667 = vmatpush1.xpose.msra.mxu0 %v1634
        %1668 = vmatprep.subr.mxu0 0.0
        %1669 = vmatpush2.xpose.msra.mxu0 0.0
        %1670 = vmatprep.subr.mxu0 0.0
        %1671 = vmatpush2.xpose.msra.mxu0 0.0
        %1672 = vmatprep.subr.mxu0 0.0
        %1673 = vmatpush2.xpose.msra.mxu0 0.0
        %1674 = vmatprep.subr.mxu0 0.0
        %1675 = vmatpush2.xpose.msra.mxu0 0.0
        %1676 = vmatprep.subr.mxu0 0.0
        %1677 = vmatpush2.xpose.msra.mxu0 0.0
        %1678 = vmatprep.subr.mxu0 0.0
        %1679 = vmatpush2.xpose.msra.mxu0 0.0
        %1680 = vmatprep.subr.mxu0 0.0
        %1681 = vmatpush2.xpose.msra.mxu0 0.0
        %1682 = vmatprep.subr.mxu0 0.0
        %1683 = vmatpush2.xpose.msra.mxu0 0.0
        %1684 = vmatprep.subr.mxu0 0.0
        %1685 = vmatpush2.xpose.msra.mxu0 0.0
        %1686 = vmatprep.subr.mxu0 0.0
        %1687 = vmatpush2.xpose.msra.mxu0 0.0
        %1688 = vmatprep.subr.mxu0 0.0
        %1689 = vmatpush2.xpose.msra.mxu0 0.0
        %1690 = vmatprep.subr.mxu0 0.0
        %1691 = vmatpush2.xpose.msra.mxu0 0.0
        %1692 = vmatprep.subr.mxu0 0.0
        %1693 = vmatpush2.xpose.msra.mxu0 0.0
        %1694 = vmatprep.subr.mxu0 0.0
        %1695 = vmatpush2.xpose.msra.mxu0 0.0
        %1696 = vmatprep.subr.mxu0 0.0
        %1697 = vmatpush2.xpose.msra.mxu0 0.0
        %1698 = vmatprep.subr.mxu0 0.0
        %1699 = vmatpush2.xpose.msra.mxu0 0.0
        %1700 = vmatprep.mubr.f32.mxu0 0.0
        %1701 = vmatmul.mubr.f32.gmra.mxu0 %v1632
        %v1702 = vpop.f32.mrf.mxu0
        %v1703 = vadd.f32 0.0, %v1702
        %v1704 = vpop.f32.mrf.mxu0
        %1705 = vdwg.mxu0
        %v1706 = vsel %vm736, %v1703, -inf
        %1707 = vmax.xlane.f32.xlu0 %v1706
        %v1708 = vpop.xlane.xlu0 %1707
        %v1709 = vsub.f32 %v1703, %v1708
        %v1710 = vmul.f32 %v1709, 1.442695
        %v1711 = vpow.pop %v1710
        %v1712 = vsel %vm736, %v1711, 0.0
        %1713 = vadd.xlane.f32.xlu0 %v1712
        %v1714 = vpop.xlane.xlu0 %1713
        %1715 = vrot.lane.b32.xlu0 %v652, 112
        %v1716 = vpop.permute.xlu0 %1715
        %v1719 = vsel %vm736, %v1711, 0
        %1721 = vmatprep.subr.mxu0 0.0
        %1722 = vmatpush1.msra.mxu0 0.0
        %1723 = vmatprep.subr.mxu0 0.0
        %1724 = vmatpush1.msra.mxu0 0.0
        %1725 = vmatprep.subr.mxu0 0.0
        %1726 = vmatpush1.msra.mxu0 0.0
        %1727 = vmatprep.subr.mxu0 0.0
        %1728 = vmatpush1.msra.mxu0 0.0
        %1729 = vmatprep.subr.mxu0 0.0
        %1730 = vmatpush1.msra.mxu0 0.0
        %1731 = vmatprep.subr.mxu0 0.0
        %1732 = vmatpush1.msra.mxu0 0.0
        %1733 = vmatprep.subr.mxu0 0.0
        %1734 = vmatpush1.msra.mxu0 0.0
        %1735 = vmatprep.subr.mxu0 0.0
        %1736 = vmatpush1.msra.mxu0 0.0
        %1737 = vmatprep.subr.mxu0 0.0
        %1738 = vmatpush1.msra.mxu0 0.0
        %1739 = vmatprep.subr.mxu0 0.0
        %1740 = vmatpush1.msra.mxu0 0.0
        %1741 = vmatprep.subr.mxu0 0.0
        %1742 = vmatpush1.msra.mxu0 0.0
        %1743 = vmatprep.subr.mxu0 0.0
        %1744 = vmatpush1.msra.mxu0 0.0
        %1745 = vmatprep.subr.mxu0 0.0
        %1746 = vmatpush1.msra.mxu0 0.0
        %1747 = vmatprep.subr.mxu0 0.0
        %1748 = vmatpush1.msra.mxu0 0.0
        %1749 = vmatprep.subr.mxu0 0.0
        %1750 = vmatpush1.msra.mxu0 0.0
        %1751 = vmatprep.subr.mxu0 0.0
        %1752 = vmatpush1.msra.mxu0 %v1716
        %1753 = vmatprep.subr.mxu0 0.0
        %1754 = vmatpush2.msra.mxu0 0.0
        %1755 = vmatprep.subr.mxu0 0.0
        %1756 = vmatpush2.msra.mxu0 0.0
        %1757 = vmatprep.subr.mxu0 0.0
        %1758 = vmatpush2.msra.mxu0 0.0
        %1759 = vmatprep.subr.mxu0 0.0
        %1760 = vmatpush2.msra.mxu0 0.0
        %1761 = vmatprep.subr.mxu0 0.0
        %1762 = vmatpush2.msra.mxu0 0.0
        %1763 = vmatprep.subr.mxu0 0.0
        %1764 = vmatpush2.msra.mxu0 0.0
        %1765 = vmatprep.subr.mxu0 0.0
        %1766 = vmatpush2.msra.mxu0 0.0
        %1767 = vmatprep.subr.mxu0 0.0
        %1768 = vmatpush2.msra.mxu0 0.0
        %1769 = vmatprep.subr.mxu0 0.0
        %1770 = vmatpush2.msra.mxu0 0.0
        %1771 = vmatprep.subr.mxu0 0.0
        %1772 = vmatpush2.msra.mxu0 0.0
        %1773 = vmatprep.subr.mxu0 0.0
        %1774 = vmatpush2.msra.mxu0 0.0
        %1775 = vmatprep.subr.mxu0 0.0
        %1776 = vmatpush2.msra.mxu0 0.0
        %1777 = vmatprep.subr.mxu0 0.0
        %1778 = vmatpush2.msra.mxu0 0.0
        %1779 = vmatprep.subr.mxu0 0.0
        %1780 = vmatpush2.msra.mxu0 0.0
        %1781 = vmatprep.subr.mxu0 0.0
        %1782 = vmatpush2.msra.mxu0 0.0
        %1783 = vmatprep.subr.mxu0 0.0
        %1784 = vmatpush2.msra.mxu0 0.0
        %1785 = vmatprep.mubr.f32.mxu0 0.0
        %1786 = vmatmul.mubr.f32.gmra.mxu0 %v1719
        %v1787 = vpop.f32.mrf.mxu0
        %v1788 = vadd.f32 0.0, %v1787
        %v1789 = vpop.f32.mrf.mxu0
        %1790 = vdwg.mxu0
        %v1791 = vrcp.pop %v1714
        %v1792 = vmul.f32 1.0, %v1791
        %v1793 = vmul.f32 %v1788, %v1792
        %v1795 = vsel %vm659, %v1793, 0
        %v1798 = vsel %vm994, %v657, 0
        %1800 = vmatprep.subr.mxu0 0.0
        %1801 = vmatpush1.msra.mxu0 0.0
        %1802 = vmatprep.subr.mxu0 0.0
        %1803 = vmatpush1.msra.mxu0 0.0
        %1804 = vmatprep.subr.mxu0 0.0
        %1805 = vmatpush1.msra.mxu0 0.0
        %1806 = vmatprep.subr.mxu0 0.0
        %1807 = vmatpush1.msra.mxu0 0.0
        %1808 = vmatprep.subr.mxu0 0.0
        %1809 = vmatpush1.msra.mxu0 0.0
        %1810 = vmatprep.subr.mxu0 0.0
        %1811 = vmatpush1.msra.mxu0 0.0
        %1812 = vmatprep.subr.mxu0 0.0
        %1813 = vmatpush1.msra.mxu0 0.0
        %1814 = vmatprep.subr.mxu0 0.0
        %1815 = vmatpush1.msra.mxu0 0.0
        %1816 = vmatprep.subr.mxu0 0.0
        %1817 = vmatpush1.msra.mxu0 0.0
        %1818 = vmatprep.subr.mxu0 0.0
        %1819 = vmatpush1.msra.mxu0 0.0
        %1820 = vmatprep.subr.mxu0 0.0
        %1821 = vmatpush1.msra.mxu0 0.0
        %1822 = vmatprep.subr.mxu0 0.0
        %1823 = vmatpush1.msra.mxu0 0.0
        %1824 = vmatprep.subr.mxu0 0.0
        %1825 = vmatpush1.msra.mxu0 0.0
        %1826 = vmatprep.subr.mxu0 0.0
        %1827 = vmatpush1.msra.mxu0 0.0
        %1828 = vmatprep.subr.mxu0 0.0
        %1829 = vmatpush1.msra.mxu0 0.0
        %1830 = vmatprep.subr.mxu0 0.0
        %1831 = vmatpush1.msra.mxu0 %v1798
        %1832 = vmatprep.subr.mxu0 0.0
        %1833 = vmatpush2.msra.mxu0 0.0
        %1834 = vmatprep.subr.mxu0 0.0
        %1835 = vmatpush2.msra.mxu0 0.0
        %1836 = vmatprep.subr.mxu0 0.0
        %1837 = vmatpush2.msra.mxu0 0.0
        %1838 = vmatprep.subr.mxu0 0.0
        %1839 = vmatpush2.msra.mxu0 0.0
        %1840 = vmatprep.subr.mxu0 0.0
        %1841 = vmatpush2.msra.mxu0 0.0
        %1842 = vmatprep.subr.mxu0 0.0
        %1843 = vmatpush2.msra.mxu0 0.0
        %1844 = vmatprep.subr.mxu0 0.0
        %1845 = vmatpush2.msra.mxu0 0.0
        %1846 = vmatprep.subr.mxu0 0.0
        %1847 = vmatpush2.msra.mxu0 0.0
        %1848 = vmatprep.subr.mxu0 0.0
        %1849 = vmatpush2.msra.mxu0 0.0
        %1850 = vmatprep.subr.mxu0 0.0
        %1851 = vmatpush2.msra.mxu0 0.0
        %1852 = vmatprep.subr.mxu0 0.0
        %1853 = vmatpush2.msra.mxu0 0.0
        %1854 = vmatprep.subr.mxu0 0.0
        %1855 = vmatpush2.msra.mxu0 0.0
        %1856 = vmatprep.subr.mxu0 0.0
        %1857 = vmatpush2.msra.mxu0 0.0
        %1858 = vmatprep.subr.mxu0 0.0
        %1859 = vmatpush2.msra.mxu0 0.0
        %1860 = vmatprep.subr.mxu0 0.0
        %1861 = vmatpush2.msra.mxu0 0.0
        %1862 = vmatprep.subr.mxu0 0.0
        %1863 = vmatpush2.msra.mxu0 0.0
        %1864 = vmatprep.mubr.f32.mxu0 0.0
        %1865 = vmatmul.mubr.f32.gmra.mxu0 %v1795
        %v1866 = vpop.f32.mrf.mxu0
        %v1867 = vadd.f32 0.0, %v1866
        %v1868 = vpop.f32.mrf.mxu0
        %1869 = vdwg.mxu0
        %v1870 = vadd.f32 %v1627, %v1867
        %1871 = vrot.lane.b32.xlu0 %v492, 108
        %v1872 = vpop.permute.xlu0 %1871
        %1873 = vrot.lane.b32.xlu0 %v571, 108
        %v1874 = vpop.permute.xlu0 %1873
        %v1875 = vsel %vm659, %v1872, 0
        %v1877 = vsel %vm659, %v1874, 0
        %1879 = vmatprep.subr.mxu0 0.0
        %1880 = vmatpush1.xpose.msra.mxu0 0.0
        %1881 = vmatprep.subr.mxu0 0.0
        %1882 = vmatpush1.xpose.msra.mxu0 0.0
        %1883 = vmatprep.subr.mxu0 0.0
        %1884 = vmatpush1.xpose.msra.mxu0 0.0
        %1885 = vmatprep.subr.mxu0 0.0
        %1886 = vmatpush1.xpose.msra.mxu0 0.0
        %1887 = vmatprep.subr.mxu0 0.0
        %1888 = vmatpush1.xpose.msra.mxu0 0.0
        %1889 = vmatprep.subr.mxu0 0.0
        %1890 = vmatpush1.xpose.msra.mxu0 0.0
        %1891 = vmatprep.subr.mxu0 0.0
        %1892 = vmatpush1.xpose.msra.mxu0 0.0
        %1893 = vmatprep.subr.mxu0 0.0
        %1894 = vmatpush1.xpose.msra.mxu0 0.0
        %1895 = vmatprep.subr.mxu0 0.0
        %1896 = vmatpush1.xpose.msra.mxu0 0.0
        %1897 = vmatprep.subr.mxu0 0.0
        %1898 = vmatpush1.xpose.msra.mxu0 0.0
        %1899 = vmatprep.subr.mxu0 0.0
        %1900 = vmatpush1.xpose.msra.mxu0 0.0
        %1901 = vmatprep.subr.mxu0 0.0
        %1902 = vmatpush1.xpose.msra.mxu0 0.0
        %1903 = vmatprep.subr.mxu0 0.0
        %1904 = vmatpush1.xpose.msra.mxu0 0.0
        %1905 = vmatprep.subr.mxu0 0.0
        %1906 = vmatpush1.xpose.msra.mxu0 0.0
        %1907 = vmatprep.subr.mxu0 0.0
        %1908 = vmatpush1.xpose.msra.mxu0 0.0
        %1909 = vmatprep.subr.mxu0 0.0
        %1910 = vmatpush1.xpose.msra.mxu0 %v1877
        %1911 = vmatprep.subr.mxu0 0.0
        %1912 = vmatpush2.xpose.msra.mxu0 0.0
        %1913 = vmatprep.subr.mxu0 0.0
        %1914 = vmatpush2.xpose.msra.mxu0 0.0
        %1915 = vmatprep.subr.mxu0 0.0
        %1916 = vmatpush2.xpose.msra.mxu0 0.0
        %1917 = vmatprep.subr.mxu0 0.0
        %1918 = vmatpush2.xpose.msra.mxu0 0.0
        %1919 = vmatprep.subr.mxu0 0.0
        %1920 = vmatpush2.xpose.msra.mxu0 0.0
        %1921 = vmatprep.subr.mxu0 0.0
        %1922 = vmatpush2.xpose.msra.mxu0 0.0
        %1923 = vmatprep.subr.mxu0 0.0
        %1924 = vmatpush2.xpose.msra.mxu0 0.0
        %1925 = vmatprep.subr.mxu0 0.0
        %1926 = vmatpush2.xpose.msra.mxu0 0.0
        %1927 = vmatprep.subr.mxu0 0.0
        %1928 = vmatpush2.xpose.msra.mxu0 0.0
        %1929 = vmatprep.subr.mxu0 0.0
        %1930 = vmatpush2.xpose.msra.mxu0 0.0
        %1931 = vmatprep.subr.mxu0 0.0
        %1932 = vmatpush2.xpose.msra.mxu0 0.0
        %1933 = vmatprep.subr.mxu0 0.0
        %1934 = vmatpush2.xpose.msra.mxu0 0.0
        %1935 = vmatprep.subr.mxu0 0.0
        %1936 = vmatpush2.xpose.msra.mxu0 0.0
        %1937 = vmatprep.subr.mxu0 0.0
        %1938 = vmatpush2.xpose.msra.mxu0 0.0
        %1939 = vmatprep.subr.mxu0 0.0
        %1940 = vmatpush2.xpose.msra.mxu0 0.0
        %1941 = vmatprep.subr.mxu0 0.0
        %1942 = vmatpush2.xpose.msra.mxu0 0.0
        %1943 = vmatprep.mubr.f32.mxu0 0.0
        %1944 = vmatmul.mubr.f32.gmra.mxu0 %v1875
        %v1945 = vpop.f32.mrf.mxu0
        %v1946 = vadd.f32 0.0, %v1945
        %v1947 = vpop.f32.mrf.mxu0
        %1948 = vdwg.mxu0
        %v1949 = vsel %vm736, %v1946, -inf
        %1950 = vmax.xlane.f32.xlu0 %v1949
        %v1951 = vpop.xlane.xlu0 %1950
        %v1952 = vsub.f32 %v1946, %v1951
        %v1953 = vmul.f32 %v1952, 1.442695
        %v1954 = vpow.pop %v1953
        %v1955 = vsel %vm736, %v1954, 0.0
        %1956 = vadd.xlane.f32.xlu0 %v1955
        %v1957 = vpop.xlane.xlu0 %1956
        %1958 = vrot.lane.b32.xlu0 %v652, 108
        %v1959 = vpop.permute.xlu0 %1958
        %v1962 = vsel %vm736, %v1954, 0
        %1964 = vmatprep.subr.mxu0 0.0
        %1965 = vmatpush1.msra.mxu0 0.0
        %1966 = vmatprep.subr.mxu0 0.0
        %1967 = vmatpush1.msra.mxu0 0.0
        %1968 = vmatprep.subr.mxu0 0.0
        %1969 = vmatpush1.msra.mxu0 0.0
        %1970 = vmatprep.subr.mxu0 0.0
        %1971 = vmatpush1.msra.mxu0 0.0
        %1972 = vmatprep.subr.mxu0 0.0
        %1973 = vmatpush1.msra.mxu0 0.0
        %1974 = vmatprep.subr.mxu0 0.0
        %1975 = vmatpush1.msra.mxu0 0.0
        %1976 = vmatprep.subr.mxu0 0.0
        %1977 = vmatpush1.msra.mxu0 0.0
        %1978 = vmatprep.subr.mxu0 0.0
        %1979 = vmatpush1.msra.mxu0 0.0
        %1980 = vmatprep.subr.mxu0 0.0
        %1981 = vmatpush1.msra.mxu0 0.0
        %1982 = vmatprep.subr.mxu0 0.0
        %1983 = vmatpush1.msra.mxu0 0.0
        %1984 = vmatprep.subr.mxu0 0.0
        %1985 = vmatpush1.msra.mxu0 0.0
        %1986 = vmatprep.subr.mxu0 0.0
        %1987 = vmatpush1.msra.mxu0 0.0
        %1988 = vmatprep.subr.mxu0 0.0
        %1989 = vmatpush1.msra.mxu0 0.0
        %1990 = vmatprep.subr.mxu0 0.0
        %1991 = vmatpush1.msra.mxu0 0.0
        %1992 = vmatprep.subr.mxu0 0.0
        %1993 = vmatpush1.msra.mxu0 0.0
        %1994 = vmatprep.subr.mxu0 0.0
        %1995 = vmatpush1.msra.mxu0 %v1959
        %1996 = vmatprep.subr.mxu0 0.0
        %1997 = vmatpush2.msra.mxu0 0.0
        %1998 = vmatprep.subr.mxu0 0.0
        %1999 = vmatpush2.msra.mxu0 0.0
        %2000 = vmatprep.subr.mxu0 0.0
        %2001 = vmatpush2.msra.mxu0 0.0
        %2002 = vmatprep.subr.mxu0 0.0
        %2003 = vmatpush2.msra.mxu0 0.0
        %2004 = vmatprep.subr.mxu0 0.0
        %2005 = vmatpush2.msra.mxu0 0.0
        %2006 = vmatprep.subr.mxu0 0.0
        %2007 = vmatpush2.msra.mxu0 0.0
        %2008 = vmatprep.subr.mxu0 0.0
        %2009 = vmatpush2.msra.mxu0 0.0
        %2010 = vmatprep.subr.mxu0 0.0
        %2011 = vmatpush2.msra.mxu0 0.0
        %2012 = vmatprep.subr.mxu0 0.0
        %2013 = vmatpush2.msra.mxu0 0.0
        %2014 = vmatprep.subr.mxu0 0.0
        %2015 = vmatpush2.msra.mxu0 0.0
        %2016 = vmatprep.subr.mxu0 0.0
        %2017 = vmatpush2.msra.mxu0 0.0
        %2018 = vmatprep.subr.mxu0 0.0
        %2019 = vmatpush2.msra.mxu0 0.0
        %2020 = vmatprep.subr.mxu0 0.0
        %2021 = vmatpush2.msra.mxu0 0.0
        %2022 = vmatprep.subr.mxu0 0.0
        %2023 = vmatpush2.msra.mxu0 0.0
        %2024 = vmatprep.subr.mxu0 0.0
        %2025 = vmatpush2.msra.mxu0 0.0
        %2026 = vmatprep.subr.mxu0 0.0
        %2027 = vmatpush2.msra.mxu0 0.0
        %2028 = vmatprep.mubr.f32.mxu0 0.0
        %2029 = vmatmul.mubr.f32.gmra.mxu0 %v1962
        %v2030 = vpop.f32.mrf.mxu0
        %v2031 = vadd.f32 0.0, %v2030
        %v2032 = vpop.f32.mrf.mxu0
        %2033 = vdwg.mxu0
        %v2034 = vrcp.pop %v1957
        %v2035 = vmul.f32 1.0, %v2034
        %v2036 = vmul.f32 %v2031, %v2035
        %v2037 = vrot.slane %v657, 4
        %v2039 = vsel %vm659, %v2036, 0
        %v2041 = vsel %vm994, %v2037, 0
        %2043 = vmatprep.subr.mxu0 0.0
        %2044 = vmatpush1.msra.mxu0 0.0
        %2045 = vmatprep.subr.mxu0 0.0
        %2046 = vmatpush1.msra.mxu0 0.0
        %2047 = vmatprep.subr.mxu0 0.0
        %2048 = vmatpush1.msra.mxu0 0.0
        %2049 = vmatprep.subr.mxu0 0.0
        %2050 = vmatpush1.msra.mxu0 0.0
        %2051 = vmatprep.subr.mxu0 0.0
        %2052 = vmatpush1.msra.mxu0 0.0
        %2053 = vmatprep.subr.mxu0 0.0
        %2054 = vmatpush1.msra.mxu0 0.0
        %2055 = vmatprep.subr.mxu0 0.0
        %2056 = vmatpush1.msra.mxu0 0.0
        %2057 = vmatprep.subr.mxu0 0.0
        %2058 = vmatpush1.msra.mxu0 0.0
        %2059 = vmatprep.subr.mxu0 0.0
        %2060 = vmatpush1.msra.mxu0 0.0
        %2061 = vmatprep.subr.mxu0 0.0
        %2062 = vmatpush1.msra.mxu0 0.0
        %2063 = vmatprep.subr.mxu0 0.0
        %2064 = vmatpush1.msra.mxu0 0.0
        %2065 = vmatprep.subr.mxu0 0.0
        %2066 = vmatpush1.msra.mxu0 0.0
        %2067 = vmatprep.subr.mxu0 0.0
        %2068 = vmatpush1.msra.mxu0 0.0
        %2069 = vmatprep.subr.mxu0 0.0
        %2070 = vmatpush1.msra.mxu0 0.0
        %2071 = vmatprep.subr.mxu0 0.0
        %2072 = vmatpush1.msra.mxu0 0.0
        %2073 = vmatprep.subr.mxu0 0.0
        %2074 = vmatpush1.msra.mxu0 %v2041
        %2075 = vmatprep.subr.mxu0 0.0
        %2076 = vmatpush2.msra.mxu0 0.0
        %2077 = vmatprep.subr.mxu0 0.0
        %2078 = vmatpush2.msra.mxu0 0.0
        %2079 = vmatprep.subr.mxu0 0.0
        %2080 = vmatpush2.msra.mxu0 0.0
        %2081 = vmatprep.subr.mxu0 0.0
        %2082 = vmatpush2.msra.mxu0 0.0
        %2083 = vmatprep.subr.mxu0 0.0
        %2084 = vmatpush2.msra.mxu0 0.0
        %2085 = vmatprep.subr.mxu0 0.0
        %2086 = vmatpush2.msra.mxu0 0.0
        %2087 = vmatprep.subr.mxu0 0.0
        %2088 = vmatpush2.msra.mxu0 0.0
        %2089 = vmatprep.subr.mxu0 0.0
        %2090 = vmatpush2.msra.mxu0 0.0
        %2091 = vmatprep.subr.mxu0 0.0
        %2092 = vmatpush2.msra.mxu0 0.0
        %2093 = vmatprep.subr.mxu0 0.0
        %2094 = vmatpush2.msra.mxu0 0.0
        %2095 = vmatprep.subr.mxu0 0.0
        %2096 = vmatpush2.msra.mxu0 0.0
        %2097 = vmatprep.subr.mxu0 0.0
        %2098 = vmatpush2.msra.mxu0 0.0
        %2099 = vmatprep.subr.mxu0 0.0
        %2100 = vmatpush2.msra.mxu0 0.0
        %2101 = vmatprep.subr.mxu0 0.0
        %2102 = vmatpush2.msra.mxu0 0.0
        %2103 = vmatprep.subr.mxu0 0.0
        %2104 = vmatpush2.msra.mxu0 0.0
        %2105 = vmatprep.subr.mxu0 0.0
        %2106 = vmatpush2.msra.mxu0 0.0
        %2107 = vmatprep.mubr.f32.mxu0 0.0
        %2108 = vmatmul.mubr.f32.gmra.mxu0 %v2039
        %v2109 = vpop.f32.mrf.mxu0
        %v2110 = vadd.f32 0.0, %v2109
        %v2111 = vpop.f32.mrf.mxu0
        %2112 = vdwg.mxu0
        %v2113 = vadd.f32 %v1870, %v2110
        %2114 = vrot.lane.b32.xlu0 %v492, 104
        %v2115 = vpop.permute.xlu0 %2114
        %2116 = vrot.lane.b32.xlu0 %v571, 104
        %v2117 = vpop.permute.xlu0 %2116
        %v2118 = vsel %vm659, %v2115, 0
        %v2120 = vsel %vm659, %v2117, 0
        %2122 = vmatprep.subr.mxu0 0.0
        %2123 = vmatpush1.xpose.msra.mxu0 0.0
        %2124 = vmatprep.subr.mxu0 0.0
        %2125 = vmatpush1.xpose.msra.mxu0 0.0
        %2126 = vmatprep.subr.mxu0 0.0
        %2127 = vmatpush1.xpose.msra.mxu0 0.0
        %2128 = vmatprep.subr.mxu0 0.0
        %2129 = vmatpush1.xpose.msra.mxu0 0.0
        %2130 = vmatprep.subr.mxu0 0.0
        %2131 = vmatpush1.xpose.msra.mxu0 0.0
        %2132 = vmatprep.subr.mxu0 0.0
        %2133 = vmatpush1.xpose.msra.mxu0 0.0
        %2134 = vmatprep.subr.mxu0 0.0
        %2135 = vmatpush1.xpose.msra.mxu0 0.0
        %2136 = vmatprep.subr.mxu0 0.0
        %2137 = vmatpush1.xpose.msra.mxu0 0.0
        %2138 = vmatprep.subr.mxu0 0.0
        %2139 = vmatpush1.xpose.msra.mxu0 0.0
        %2140 = vmatprep.subr.mxu0 0.0
        %2141 = vmatpush1.xpose.msra.mxu0 0.0
        %2142 = vmatprep.subr.mxu0 0.0
        %2143 = vmatpush1.xpose.msra.mxu0 0.0
        %2144 = vmatprep.subr.mxu0 0.0
        %2145 = vmatpush1.xpose.msra.mxu0 0.0
        %2146 = vmatprep.subr.mxu0 0.0
        %2147 = vmatpush1.xpose.msra.mxu0 0.0
        %2148 = vmatprep.subr.mxu0 0.0
        %2149 = vmatpush1.xpose.msra.mxu0 0.0
        %2150 = vmatprep.subr.mxu0 0.0
        %2151 = vmatpush1.xpose.msra.mxu0 0.0
        %2152 = vmatprep.subr.mxu0 0.0
        %2153 = vmatpush1.xpose.msra.mxu0 %v2120
        %2154 = vmatprep.subr.mxu0 0.0
        %2155 = vmatpush2.xpose.msra.mxu0 0.0
        %2156 = vmatprep.subr.mxu0 0.0
        %2157 = vmatpush2.xpose.msra.mxu0 0.0
        %2158 = vmatprep.subr.mxu0 0.0
        %2159 = vmatpush2.xpose.msra.mxu0 0.0
        %2160 = vmatprep.subr.mxu0 0.0
        %2161 = vmatpush2.xpose.msra.mxu0 0.0
        %2162 = vmatprep.subr.mxu0 0.0
        %2163 = vmatpush2.xpose.msra.mxu0 0.0
        %2164 = vmatprep.subr.mxu0 0.0
        %2165 = vmatpush2.xpose.msra.mxu0 0.0
        %2166 = vmatprep.subr.mxu0 0.0
        %2167 = vmatpush2.xpose.msra.mxu0 0.0
        %2168 = vmatprep.subr.mxu0 0.0
        %2169 = vmatpush2.xpose.msra.mxu0 0.0
        %2170 = vmatprep.subr.mxu0 0.0
        %2171 = vmatpush2.xpose.msra.mxu0 0.0
        %2172 = vmatprep.subr.mxu0 0.0
        %2173 = vmatpush2.xpose.msra.mxu0 0.0
        %2174 = vmatprep.subr.mxu0 0.0
        %2175 = vmatpush2.xpose.msra.mxu0 0.0
        %2176 = vmatprep.subr.mxu0 0.0
        %2177 = vmatpush2.xpose.msra.mxu0 0.0
        %2178 = vmatprep.subr.mxu0 0.0
        %2179 = vmatpush2.xpose.msra.mxu0 0.0
        %2180 = vmatprep.subr.mxu0 0.0
        %2181 = vmatpush2.xpose.msra.mxu0 0.0
        %2182 = vmatprep.subr.mxu0 0.0
        %2183 = vmatpush2.xpose.msra.mxu0 0.0
        %2184 = vmatprep.subr.mxu0 0.0
        %2185 = vmatpush2.xpose.msra.mxu0 0.0
        %2186 = vmatprep.mubr.f32.mxu0 0.0
        %2187 = vmatmul.mubr.f32.gmra.mxu0 %v2118
        %v2188 = vpop.f32.mrf.mxu0
        %v2189 = vadd.f32 0.0, %v2188
        %v2190 = vpop.f32.mrf.mxu0
        %2191 = vdwg.mxu0
        %v2192 = vsel %vm736, %v2189, -inf
        %2193 = vmax.xlane.f32.xlu0 %v2192
        %v2194 = vpop.xlane.xlu0 %2193
        %v2195 = vsub.f32 %v2189, %v2194
        %v2196 = vmul.f32 %v2195, 1.442695
        %v2197 = vpow.pop %v2196
        %v2198 = vsel %vm736, %v2197, 0.0
        %2199 = vadd.xlane.f32.xlu0 %v2198
        %v2200 = vpop.xlane.xlu0 %2199
        %2201 = vrot.lane.b32.xlu0 %v652, 104
        %v2202 = vpop.permute.xlu0 %2201
        %v2205 = vsel %vm736, %v2197, 0
        %2207 = vmatprep.subr.mxu0 0.0
        %2208 = vmatpush1.msra.mxu0 0.0
        %2209 = vmatprep.subr.mxu0 0.0
        %2210 = vmatpush1.msra.mxu0 0.0
        %2211 = vmatprep.subr.mxu0 0.0
        %2212 = vmatpush1.msra.mxu0 0.0
        %2213 = vmatprep.subr.mxu0 0.0
        %2214 = vmatpush1.msra.mxu0 0.0
        %2215 = vmatprep.subr.mxu0 0.0
        %2216 = vmatpush1.msra.mxu0 0.0
        %2217 = vmatprep.subr.mxu0 0.0
        %2218 = vmatpush1.msra.mxu0 0.0
        %2219 = vmatprep.subr.mxu0 0.0
        %2220 = vmatpush1.msra.mxu0 0.0
        %2221 = vmatprep.subr.mxu0 0.0
        %2222 = vmatpush1.msra.mxu0 0.0
        %2223 = vmatprep.subr.mxu0 0.0
        %2224 = vmatpush1.msra.mxu0 0.0
        %2225 = vmatprep.subr.mxu0 0.0
        %2226 = vmatpush1.msra.mxu0 0.0
        %2227 = vmatprep.subr.mxu0 0.0
        %2228 = vmatpush1.msra.mxu0 0.0
        %2229 = vmatprep.subr.mxu0 0.0
        %2230 = vmatpush1.msra.mxu0 0.0
        %2231 = vmatprep.subr.mxu0 0.0
        %2232 = vmatpush1.msra.mxu0 0.0
        %2233 = vmatprep.subr.mxu0 0.0
        %2234 = vmatpush1.msra.mxu0 0.0
        %2235 = vmatprep.subr.mxu0 0.0
        %2236 = vmatpush1.msra.mxu0 0.0
        %2237 = vmatprep.subr.mxu0 0.0
        %2238 = vmatpush1.msra.mxu0 %v2202
        %2239 = vmatprep.subr.mxu0 0.0
        %2240 = vmatpush2.msra.mxu0 0.0
        %2241 = vmatprep.subr.mxu0 0.0
        %2242 = vmatpush2.msra.mxu0 0.0
        %2243 = vmatprep.subr.mxu0 0.0
        %2244 = vmatpush2.msra.mxu0 0.0
        %2245 = vmatprep.subr.mxu0 0.0
        %2246 = vmatpush2.msra.mxu0 0.0
        %2247 = vmatprep.subr.mxu0 0.0
        %2248 = vmatpush2.msra.mxu0 0.0
        %2249 = vmatprep.subr.mxu0 0.0
        %2250 = vmatpush2.msra.mxu0 0.0
        %2251 = vmatprep.subr.mxu0 0.0
        %2252 = vmatpush2.msra.mxu0 0.0
        %2253 = vmatprep.subr.mxu0 0.0
        %2254 = vmatpush2.msra.mxu0 0.0
        %2255 = vmatprep.subr.mxu0 0.0
        %2256 = vmatpush2.msra.mxu0 0.0
        %2257 = vmatprep.subr.mxu0 0.0
        %2258 = vmatpush2.msra.mxu0 0.0
        %2259 = vmatprep.subr.mxu0 0.0
        %2260 = vmatpush2.msra.mxu0 0.0
        %2261 = vmatprep.subr.mxu0 0.0
        %2262 = vmatpush2.msra.mxu0 0.0
        %2263 = vmatprep.subr.mxu0 0.0
        %2264 = vmatpush2.msra.mxu0 0.0
        %2265 = vmatprep.subr.mxu0 0.0
        %2266 = vmatpush2.msra.mxu0 0.0
        %2267 = vmatprep.subr.mxu0 0.0
        %2268 = vmatpush2.msra.mxu0 0.0
        %2269 = vmatprep.subr.mxu0 0.0
        %2270 = vmatpush2.msra.mxu0 0.0
        %2271 = vmatprep.mubr.f32.mxu0 0.0
        %2272 = vmatmul.mubr.f32.gmra.mxu0 %v2205
        %v2273 = vpop.f32.mrf.mxu0
        %v2274 = vadd.f32 0.0, %v2273
        %v2275 = vpop.f32.mrf.mxu0
        %2276 = vdwg.mxu0
        %v2277 = vrcp.pop %v2200
        %v2278 = vmul.f32 1.0, %v2277
        %v2279 = vmul.f32 %v2274, %v2278
        %v2281 = vsel %vm659, %v2279, 0
        %v2284 = vsel %vm994, %v658, 0
        %2286 = vmatprep.subr.mxu0 0.0
        %2287 = vmatpush1.msra.mxu0 0.0
        %2288 = vmatprep.subr.mxu0 0.0
        %2289 = vmatpush1.msra.mxu0 0.0
        %2290 = vmatprep.subr.mxu0 0.0
        %2291 = vmatpush1.msra.mxu0 0.0
        %2292 = vmatprep.subr.mxu0 0.0
        %2293 = vmatpush1.msra.mxu0 0.0
        %2294 = vmatprep.subr.mxu0 0.0
        %2295 = vmatpush1.msra.mxu0 0.0
        %2296 = vmatprep.subr.mxu0 0.0
        %2297 = vmatpush1.msra.mxu0 0.0
        %2298 = vmatprep.subr.mxu0 0.0
        %2299 = vmatpush1.msra.mxu0 0.0
        %2300 = vmatprep.subr.mxu0 0.0
        %2301 = vmatpush1.msra.mxu0 0.0
        %2302 = vmatprep.subr.mxu0 0.0
        %2303 = vmatpush1.msra.mxu0 0.0
        %2304 = vmatprep.subr.mxu0 0.0
        %2305 = vmatpush1.msra.mxu0 0.0
        %2306 = vmatprep.subr.mxu0 0.0
        %2307 = vmatpush1.msra.mxu0 0.0
        %2308 = vmatprep.subr.mxu0 0.0
        %2309 = vmatpush1.msra.mxu0 0.0
        %2310 = vmatprep.subr.mxu0 0.0
        %2311 = vmatpush1.msra.mxu0 0.0
        %2312 = vmatprep.subr.mxu0 0.0
        %2313 = vmatpush1.msra.mxu0 0.0
        %2314 = vmatprep.subr.mxu0 0.0
        %2315 = vmatpush1.msra.mxu0 0.0
        %2316 = vmatprep.subr.mxu0 0.0
        %2317 = vmatpush1.msra.mxu0 %v2284
        %2318 = vmatprep.subr.mxu0 0.0
        %2319 = vmatpush2.msra.mxu0 0.0
        %2320 = vmatprep.subr.mxu0 0.0
        %2321 = vmatpush2.msra.mxu0 0.0
        %2322 = vmatprep.subr.mxu0 0.0
        %2323 = vmatpush2.msra.mxu0 0.0
        %2324 = vmatprep.subr.mxu0 0.0
        %2325 = vmatpush2.msra.mxu0 0.0
        %2326 = vmatprep.subr.mxu0 0.0
        %2327 = vmatpush2.msra.mxu0 0.0
        %2328 = vmatprep.subr.mxu0 0.0
        %2329 = vmatpush2.msra.mxu0 0.0
        %2330 = vmatprep.subr.mxu0 0.0
        %2331 = vmatpush2.msra.mxu0 0.0
        %2332 = vmatprep.subr.mxu0 0.0
        %2333 = vmatpush2.msra.mxu0 0.0
        %2334 = vmatprep.subr.mxu0 0.0
        %2335 = vmatpush2.msra.mxu0 0.0
        %2336 = vmatprep.subr.mxu0 0.0
        %2337 = vmatpush2.msra.mxu0 0.0
        %2338 = vmatprep.subr.mxu0 0.0
        %2339 = vmatpush2.msra.mxu0 0.0
        %2340 = vmatprep.subr.mxu0 0.0
        %2341 = vmatpush2.msra.mxu0 0.0
        %2342 = vmatprep.subr.mxu0 0.0
        %2343 = vmatpush2.msra.mxu0 0.0
        %2344 = vmatprep.subr.mxu0 0.0
        %2345 = vmatpush2.msra.mxu0 0.0
        %2346 = vmatprep.subr.mxu0 0.0
        %2347 = vmatpush2.msra.mxu0 0.0
        %2348 = vmatprep.subr.mxu0 0.0
        %2349 = vmatpush2.msra.mxu0 0.0
        %2350 = vmatprep.mubr.f32.mxu0 0.0
        %2351 = vmatmul.mubr.f32.gmra.mxu0 %v2281
        %v2352 = vpop.f32.mrf.mxu0
        %v2353 = vadd.f32 0.0, %v2352
        %v2354 = vpop.f32.mrf.mxu0
        %2355 = vdwg.mxu0
        %v2356 = vadd.f32 %v2113, %v2353
        %2357 = vrot.lane.b32.xlu0 %v492, 100
        %v2358 = vpop.permute.xlu0 %2357
        %2359 = vrot.lane.b32.xlu0 %v571, 100
        %v2360 = vpop.permute.xlu0 %2359
        %v2361 = vsel %vm659, %v2358, 0
        %v2363 = vsel %vm659, %v2360, 0
        %2365 = vmatprep.subr.mxu0 0.0
        %2366 = vmatpush1.xpose.msra.mxu0 0.0
        %2367 = vmatprep.subr.mxu0 0.0
        %2368 = vmatpush1.xpose.msra.mxu0 0.0
        %2369 = vmatprep.subr.mxu0 0.0
        %2370 = vmatpush1.xpose.msra.mxu0 0.0
        %2371 = vmatprep.subr.mxu0 0.0
        %2372 = vmatpush1.xpose.msra.mxu0 0.0
        %2373 = vmatprep.subr.mxu0 0.0
        %2374 = vmatpush1.xpose.msra.mxu0 0.0
        %2375 = vmatprep.subr.mxu0 0.0
        %2376 = vmatpush1.xpose.msra.mxu0 0.0
        %2377 = vmatprep.subr.mxu0 0.0
        %2378 = vmatpush1.xpose.msra.mxu0 0.0
        %2379 = vmatprep.subr.mxu0 0.0
        %2380 = vmatpush1.xpose.msra.mxu0 0.0
        %2381 = vmatprep.subr.mxu0 0.0
        %2382 = vmatpush1.xpose.msra.mxu0 0.0
        %2383 = vmatprep.subr.mxu0 0.0
        %2384 = vmatpush1.xpose.msra.mxu0 0.0
        %2385 = vmatprep.subr.mxu0 0.0
        %2386 = vmatpush1.xpose.msra.mxu0 0.0
        %2387 = vmatprep.subr.mxu0 0.0
        %2388 = vmatpush1.xpose.msra.mxu0 0.0
        %2389 = vmatprep.subr.mxu0 0.0
        %2390 = vmatpush1.xpose.msra.mxu0 0.0
        %2391 = vmatprep.subr.mxu0 0.0
        %2392 = vmatpush1.xpose.msra.mxu0 0.0
        %2393 = vmatprep.subr.mxu0 0.0
        %2394 = vmatpush1.xpose.msra.mxu0 0.0
        %2395 = vmatprep.subr.mxu0 0.0
        %2396 = vmatpush1.xpose.msra.mxu0 %v2363
        %2397 = vmatprep.subr.mxu0 0.0
        %2398 = vmatpush2.xpose.msra.mxu0 0.0
        %2399 = vmatprep.subr.mxu0 0.0
        %2400 = vmatpush2.xpose.msra.mxu0 0.0
        %2401 = vmatprep.subr.mxu0 0.0
        %2402 = vmatpush2.xpose.msra.mxu0 0.0
        %2403 = vmatprep.subr.mxu0 0.0
        %2404 = vmatpush2.xpose.msra.mxu0 0.0
        %2405 = vmatprep.subr.mxu0 0.0
        %2406 = vmatpush2.xpose.msra.mxu0 0.0
        %2407 = vmatprep.subr.mxu0 0.0
        %2408 = vmatpush2.xpose.msra.mxu0 0.0
        %2409 = vmatprep.subr.mxu0 0.0
        %2410 = vmatpush2.xpose.msra.mxu0 0.0
        %2411 = vmatprep.subr.mxu0 0.0
        %2412 = vmatpush2.xpose.msra.mxu0 0.0
        %2413 = vmatprep.subr.mxu0 0.0
        %2414 = vmatpush2.xpose.msra.mxu0 0.0
        %2415 = vmatprep.subr.mxu0 0.0
        %2416 = vmatpush2.xpose.msra.mxu0 0.0
        %2417 = vmatprep.subr.mxu0 0.0
        %2418 = vmatpush2.xpose.msra.mxu0 0.0
        %2419 = vmatprep.subr.mxu0 0.0
        %2420 = vmatpush2.xpose.msra.mxu0 0.0
        %2421 = vmatprep.subr.mxu0 0.0
        %2422 = vmatpush2.xpose.msra.mxu0 0.0
        %2423 = vmatprep.subr.mxu0 0.0
        %2424 = vmatpush2.xpose.msra.mxu0 0.0
        %2425 = vmatprep.subr.mxu0 0.0
        %2426 = vmatpush2.xpose.msra.mxu0 0.0
        %2427 = vmatprep.subr.mxu0 0.0
        %2428 = vmatpush2.xpose.msra.mxu0 0.0
        %2429 = vmatprep.mubr.f32.mxu0 0.0
        %2430 = vmatmul.mubr.f32.gmra.mxu0 %v2361
        %v2431 = vpop.f32.mrf.mxu0
        %v2432 = vadd.f32 0.0, %v2431
        %v2433 = vpop.f32.mrf.mxu0
        %2434 = vdwg.mxu0
        %v2435 = vsel %vm736, %v2432, -inf
        %2436 = vmax.xlane.f32.xlu0 %v2435
        %v2437 = vpop.xlane.xlu0 %2436
        %v2438 = vsub.f32 %v2432, %v2437
        %v2439 = vmul.f32 %v2438, 1.442695
        %v2440 = vpow.pop %v2439
        %v2441 = vsel %vm736, %v2440, 0.0
        %2442 = vadd.xlane.f32.xlu0 %v2441
        %v2443 = vpop.xlane.xlu0 %2442
        %2444 = vrot.lane.b32.xlu0 %v652, 100
        %v2445 = vpop.permute.xlu0 %2444
        %v2448 = vsel %vm736, %v2440, 0
        %2450 = vmatprep.subr.mxu0 0.0
        %2451 = vmatpush1.msra.mxu0 0.0
        %2452 = vmatprep.subr.mxu0 0.0
        %2453 = vmatpush1.msra.mxu0 0.0
        %2454 = vmatprep.subr.mxu0 0.0
        %2455 = vmatpush1.msra.mxu0 0.0
        %2456 = vmatprep.subr.mxu0 0.0
        %2457 = vmatpush1.msra.mxu0 0.0
        %2458 = vmatprep.subr.mxu0 0.0
        %2459 = vmatpush1.msra.mxu0 0.0
        %2460 = vmatprep.subr.mxu0 0.0
        %2461 = vmatpush1.msra.mxu0 0.0
        %2462 = vmatprep.subr.mxu0 0.0
        %2463 = vmatpush1.msra.mxu0 0.0
        %2464 = vmatprep.subr.mxu0 0.0
        %2465 = vmatpush1.msra.mxu0 0.0
        %2466 = vmatprep.subr.mxu0 0.0
        %2467 = vmatpush1.msra.mxu0 0.0
        %2468 = vmatprep.subr.mxu0 0.0
        %2469 = vmatpush1.msra.mxu0 0.0
        %2470 = vmatprep.subr.mxu0 0.0
        %2471 = vmatpush1.msra.mxu0 0.0
        %2472 = vmatprep.subr.mxu0 0.0
        %2473 = vmatpush1.msra.mxu0 0.0
        %2474 = vmatprep.subr.mxu0 0.0
        %2475 = vmatpush1.msra.mxu0 0.0
        %2476 = vmatprep.subr.mxu0 0.0
        %2477 = vmatpush1.msra.mxu0 0.0
        %2478 = vmatprep.subr.mxu0 0.0
        %2479 = vmatpush1.msra.mxu0 0.0
        %2480 = vmatprep.subr.mxu0 0.0
        %2481 = vmatpush1.msra.mxu0 %v2445
        %2482 = vmatprep.subr.mxu0 0.0
        %2483 = vmatpush2.msra.mxu0 0.0
        %2484 = vmatprep.subr.mxu0 0.0
        %2485 = vmatpush2.msra.mxu0 0.0
        %2486 = vmatprep.subr.mxu0 0.0
        %2487 = vmatpush2.msra.mxu0 0.0
        %2488 = vmatprep.subr.mxu0 0.0
        %2489 = vmatpush2.msra.mxu0 0.0
        %2490 = vmatprep.subr.mxu0 0.0
        %2491 = vmatpush2.msra.mxu0 0.0
        %2492 = vmatprep.subr.mxu0 0.0
        %2493 = vmatpush2.msra.mxu0 0.0
        %2494 = vmatprep.subr.mxu0 0.0
        %2495 = vmatpush2.msra.mxu0 0.0
        %2496 = vmatprep.subr.mxu0 0.0
        %2497 = vmatpush2.msra.mxu0 0.0
        %2498 = vmatprep.subr.mxu0 0.0
        %2499 = vmatpush2.msra.mxu0 0.0
        %2500 = vmatprep.subr.mxu0 0.0
        %2501 = vmatpush2.msra.mxu0 0.0
        %2502 = vmatprep.subr.mxu0 0.0
        %2503 = vmatpush2.msra.mxu0 0.0
        %2504 = vmatprep.subr.mxu0 0.0
        %2505 = vmatpush2.msra.mxu0 0.0
        %2506 = vmatprep.subr.mxu0 0.0
        %2507 = vmatpush2.msra.mxu0 0.0
        %2508 = vmatprep.subr.mxu0 0.0
        %2509 = vmatpush2.msra.mxu0 0.0
        %2510 = vmatprep.subr.mxu0 0.0
        %2511 = vmatpush2.msra.mxu0 0.0
        %2512 = vmatprep.subr.mxu0 0.0
        %2513 = vmatpush2.msra.mxu0 0.0
        %2514 = vmatprep.mubr.f32.mxu0 0.0
        %2515 = vmatmul.mubr.f32.gmra.mxu0 %v2448
        %v2516 = vpop.f32.mrf.mxu0
        %v2517 = vadd.f32 0.0, %v2516
        %v2518 = vpop.f32.mrf.mxu0
        %2519 = vdwg.mxu0
        %v2520 = vrcp.pop %v2443
        %v2521 = vmul.f32 1.0, %v2520
        %v2522 = vmul.f32 %v2517, %v2521
        %v2523 = vrot.slane %v658, 4
        %v2525 = vsel %vm659, %v2522, 0
        %v2527 = vsel %vm994, %v2523, 0
        %2529 = vmatprep.subr.mxu0 0.0
        %2530 = vmatpush1.msra.mxu0 0.0
        %2531 = vmatprep.subr.mxu0 0.0
        %2532 = vmatpush1.msra.mxu0 0.0
        %2533 = vmatprep.subr.mxu0 0.0
        %2534 = vmatpush1.msra.mxu0 0.0
        %2535 = vmatprep.subr.mxu0 0.0
        %2536 = vmatpush1.msra.mxu0 0.0
        %2537 = vmatprep.subr.mxu0 0.0
        %2538 = vmatpush1.msra.mxu0 0.0
        %2539 = vmatprep.subr.mxu0 0.0
        %2540 = vmatpush1.msra.mxu0 0.0
        %2541 = vmatprep.subr.mxu0 0.0
        %2542 = vmatpush1.msra.mxu0 0.0
        %2543 = vmatprep.subr.mxu0 0.0
        %2544 = vmatpush1.msra.mxu0 0.0
        %2545 = vmatprep.subr.mxu0 0.0
        %2546 = vmatpush1.msra.mxu0 0.0
        %2547 = vmatprep.subr.mxu0 0.0
        %2548 = vmatpush1.msra.mxu0 0.0
        %2549 = vmatprep.subr.mxu0 0.0
        %2550 = vmatpush1.msra.mxu0 0.0
        %2551 = vmatprep.subr.mxu0 0.0
        %2552 = vmatpush1.msra.mxu0 0.0
        %2553 = vmatprep.subr.mxu0 0.0
        %2554 = vmatpush1.msra.mxu0 0.0
        %2555 = vmatprep.subr.mxu0 0.0
        %2556 = vmatpush1.msra.mxu0 0.0
        %2557 = vmatprep.subr.mxu0 0.0
        %2558 = vmatpush1.msra.mxu0 0.0
        %2559 = vmatprep.subr.mxu0 0.0
        %2560 = vmatpush1.msra.mxu0 %v2527
        %2561 = vmatprep.subr.mxu0 0.0
        %2562 = vmatpush2.msra.mxu0 0.0
        %2563 = vmatprep.subr.mxu0 0.0
        %2564 = vmatpush2.msra.mxu0 0.0
        %2565 = vmatprep.subr.mxu0 0.0
        %2566 = vmatpush2.msra.mxu0 0.0
        %2567 = vmatprep.subr.mxu0 0.0
        %2568 = vmatpush2.msra.mxu0 0.0
        %2569 = vmatprep.subr.mxu0 0.0
        %2570 = vmatpush2.msra.mxu0 0.0
        %2571 = vmatprep.subr.mxu0 0.0
        %2572 = vmatpush2.msra.mxu0 0.0
        %2573 = vmatprep.subr.mxu0 0.0
        %2574 = vmatpush2.msra.mxu0 0.0
        %2575 = vmatprep.subr.mxu0 0.0
        %2576 = vmatpush2.msra.mxu0 0.0
        %2577 = vmatprep.subr.mxu0 0.0
        %2578 = vmatpush2.msra.mxu0 0.0
        %2579 = vmatprep.subr.mxu0 0.0
        %2580 = vmatpush2.msra.mxu0 0.0
        %2581 = vmatprep.subr.mxu0 0.0
        %2582 = vmatpush2.msra.mxu0 0.0
        %2583 = vmatprep.subr.mxu0 0.0
        %2584 = vmatpush2.msra.mxu0 0.0
        %2585 = vmatprep.subr.mxu0 0.0
        %2586 = vmatpush2.msra.mxu0 0.0
        %2587 = vmatprep.subr.mxu0 0.0
        %2588 = vmatpush2.msra.mxu0 0.0
        %2589 = vmatprep.subr.mxu0 0.0
        %2590 = vmatpush2.msra.mxu0 0.0
        %2591 = vmatprep.subr.mxu0 0.0
        %2592 = vmatpush2.msra.mxu0 0.0
        %2593 = vmatprep.mubr.f32.mxu0 0.0
        %2594 = vmatmul.mubr.f32.gmra.mxu0 %v2525
        %v2595 = vpop.f32.mrf.mxu0
        %v2596 = vadd.f32 0.0, %v2595
        %v2597 = vpop.f32.mrf.mxu0
        %2598 = vdwg.mxu0
        %v2599 = vadd.f32 %v2356, %v2596
        %v2600 = vld [vmem:[%s8] sm:$0x1]
        %v2602 = vlaneseq
        %v2603 = vshrl.u32 %v2602, 7
        %v2604 = vsub.s32 0, %v2603
        %v2605 = vrot.slane %v2600, %v2604
        %v2607 = vadd.f32 %v2599, %v2605
        %2608 = vst.msk [vmem:[%s405] sm:$0xff] %vm418, %v2607
        %s2609 = sand.u32 %s230, 1
        %s2610 = scalar_lea.sflag [#allocation4], %s2609
        %s2611 = sand.u32 %s230, 1
        %s2612 = smul.addr %s2611, 8
        %s2613 = scalar_lea.vmem [#allocation11], %s2612
        // Predicated region
        $region77: #{tpu_custom_call.1} parent=55 // pred_check
          %p2614 = pneg %p240
        $region78: #{tpu_custom_call.1} parent=55 // pred_check_branch
          %2616 = sbr.rel (%p2614) target = $region80
        $region79: #{tpu_custom_call.1} parent=55 // pred_region
          %s2618 = ssub.s32 128, 128
          %2619 = vsyncadd %s2610, %s2618
          %s2620 = smul.addr %s28, 128
          %s2621 = scalar_lea.hbm %s9, %s2620
          %s2623 = sshll.u32 %s2613, 4
          %s2624 = int_to_ptr.vmem [resolvable:$true] %s2623
          %2626 = dma.vmem_to_hbm [thread:$0]  %s2624, 128, %s2621, %s2610
        $region80: #{tpu_custom_call.1} parent=55 // pred_fallthru
          _
      $region56: #{tpu_custom_call.1} parent=5 // pred_fallthru
        _
      %p2627 = scmp.le.s32.totalorder 2, %s23
      // Predicated region
      $region81: #{tpu_custom_call.1} parent=5 // pred_check
        %p2628 = pneg %p2627
      $region82: #{tpu_custom_call.1} parent=5 // pred_check_branch
        %2630 = sbr.rel (%p2628) target = $region84
      $region83: #{tpu_custom_call.1} parent=5 // pred_region
        %s2631 = ssub.s32 %s23, 2
        // Predicated region
        $region85: #{tpu_custom_call.1} parent=83 // pred_check
          %p2632 = pneg %p246
        $region86: #{tpu_custom_call.1} parent=83 // pred_check_branch
          %2634 = sbr.rel (%p2632) target = $region88
        $region87: #{tpu_custom_call.1} parent=83 // pred_region
          %s2635 = sand.u32 %s231, 1
          %s2636 = scalar_lea.sflag [#allocation4], %s2635
          %s2637 = sand.u32 %s231, 1
          %s2638 = smul.addr %s2637, 8
          %s2639 = scalar_lea.vmem [#allocation11], %s2638
          %2640 = dma.done %s2636, 128
        $region88: #{tpu_custom_call.1} parent=83 // pred_fallthru
          _
      $region84: #{tpu_custom_call.1} parent=5 // pred_fallthru
        _
    $region6: #{tpu_custom_call.1} parent=1 // loop_footer
      %s27 = sadd.s32 1, %s23
    $region7: #{tpu_custom_call.1} parent=1 // loop_footer_branch
      %22 = sbr.rel target = $region3
    $region8: #{tpu_custom_call.1} parent=1 // loop_exit
      _
    %2641 = vsyncpa [#allocation3], 1
    %s2642 = scalar_lea.sflag [#allocation3], 1
    %2643 = vsyncpa %s2642, 1
    %2644 = vsyncpa [#allocation6], 1
    %2645 = vsyncpa [#allocation9], 1
    %2646 = vsyncpa [#allocation4], 1
    %s2647 = scalar_lea.sflag [#allocation4], 1
    %2648 = vsyncpa %s2647, 1

</llo_original>
